<compile_context>
chip_gen: v7x
topology: tpu7x:2x2x1
jax: 0.10.0
libtpu: 0.0.40
codegen_flags: <defaults>
</compile_context>

<pallas_src>
import functools

import jax
import jax.numpy as jnp
from jax.experimental import pallas as pl
from jax.experimental.pallas import tpu as pltpu


# ----------------------------------------------------------------------------
# The fused Pallas kernel (one grid step == one batch element)
# ----------------------------------------------------------------------------
def _mlfa_kernel(x1_ref, x2_ref, x3_ref,
                 wf_ref, bfus_ref, wspa_ref, bspa_ref,
                 wlA_ref, wlB_ref, wlc_ref,
                 wcf1_ref, bcf1_ref, wcf2_ref, bcf2_ref,
                 mask_ref, o_ref, *, W):
    f32 = jnp.float32
    bf16 = jnp.bfloat16

    x1 = x1_ref[0]                                     # (C, HW) bf16
    x2 = x2_ref[0]
    x3 = x3_ref[0]
    wf0, wf1, wf2 = wf_ref[0], wf_ref[1], wf_ref[2]    # (C, C) bf16, BN-scaled
    bfus = bfus_ref[...]                               # (C, 1) f32

    # --- fusion: BN(conv1x1(cat(x1, up(x2), up(x3)))) ------------------------
    fused = (jnp.dot(wf0, x1, preferred_element_type=f32)
             + jnp.dot(wf1, x2, preferred_element_type=f32)
             + jnp.dot(wf2, x3, preferred_element_type=f32)
             + bfus)                                   # (C, HW) f32
    fused_bf = fused.astype(bf16)

    # --- spatial attention: sigmoid(BN(conv1x1 C->1)) ------------------------
    spa = jax.nn.sigmoid(
        jnp.dot(wspa_ref[...], fused_bf, preferred_element_type=f32)
        + bspa_ref[...])                               # (1, HW) f32

    # --- level weights: softmax(selectattn(cat(wl(avg), wl(max)))) -----------
    # weight_level + selectattention (+ their BNs) pre-folded into A, B, c.
    avg = jnp.mean(fused, axis=1, keepdims=True)       # (C, 1) AdaptiveAvgPool2d(1)
    mx = jnp.max(fused, axis=1, keepdims=True)         # (C, 1) AdaptiveMaxPool2d(1)
    s = (jnp.dot(wlA_ref[...], avg, preferred_element_type=f32)
         + jnp.dot(wlB_ref[...], mx, preferred_element_type=f32)
         + wlc_ref[...])                               # (4, 1) f32
    smax = jnp.maximum(jnp.maximum(s[0:1], s[1:2]),
                       jnp.maximum(s[2:3], s[3:4]))    # (1, 1)
    e = jnp.exp(s - smax)
    lw = e / (e[0:1] + e[1:2] + e[2:3] + e[3:4])       # (4, 1) softmax(dim=1)

    # --- weighted fusion: BN(conv1x1(x123 * spa * levelweights)) -------------
    # conv is linear => conv(x_l * spa * lw_l) == lw_l * conv_block_l(x_l*spa)
    def weighted_level(xl, wl_blk, lvl_w):
        xw = (xl.astype(f32) * spa).astype(bf16)       # elementwise stays f32
        return lvl_w * jnp.dot(wl_blk, xw, preferred_element_type=f32)

    weighted = (weighted_level(x1, wf0, lw[0:1, 0:1])
                + weighted_level(x2, wf1, lw[1:2, 0:1])
                + weighted_level(x3, wf2, lw[2:3, 0:1])
                + bfus)                                # (C, HW) f32

    # --- ConcateFusion: conv3x3(cat(fused, weighted), pad=1) + BN + ReLU -----
    # im2col from lane-rotated taps (pltpu.roll -> XLU); boundary zeros via
    # precomputed 0/1 masks, so no explicit padding is ever materialized.
    cat2 = jnp.concatenate([fused, weighted], axis=0)  # (2C, HW) f32
    masks = mask_ref[...]                              # (9, HW) f32 (0/1)
    HW = cat2.shape[1]
    taps = []
    k = 0
    for dy in (-1, 0, 1):
        for dx in (-1, 0, 1):
            d = dy * W + dx
            if d == 0:
                taps.append(cat2)                      # centre tap: always valid
            else:
                shifted = pltpu.roll(cat2, shift=(-d) % HW, axis=1)
                taps.append(shifted * masks[k:k + 1, :])
            k += 1
    im2col = jnp.concatenate(taps, axis=0).astype(bf16)            # (9*2C, HW)
    h = (jnp.dot(wcf1_ref[...], im2col, preferred_element_type=f32)
         + bcf1_ref[...])                                          # (C, HW)
    h = jnp.maximum(h, 0.0).astype(bf16)               # ReLU; Dropout2d eval = id

    # --- final conv1x1 (C -> OUTC) + BN ---------------------------------------
    out = (jnp.dot(wcf2_ref[...], h, preferred_element_type=f32)
           + bcf2_ref[...])                                        # (OUTC, HW)
    o_ref[0] = out


# ----------------------------------------------------------------------------
# pallas_call wrapper
# ----------------------------------------------------------------------------
def _mlfa_pallas(x1f, x2f, x3f, kp, masks, *, C, OUTC, H, W):
    B = x1f.shape[0]
    HW = H * W

    act_spec = pl.BlockSpec((1, C, HW), lambda b: (b, 0, 0))

    def resident(arr):                      # full array, same block every step
        n = arr.ndim
        return pl.BlockSpec(arr.shape, lambda b, n=n: (0,) * n)

    operands = (x1f, x2f, x3f,
                kp["wf"], kp["bfus"], kp["wspa"], kp["bspa"],
                kp["wlA"], kp["wlB"], kp["wlc"],
                kp["wcf1"], kp["bcf1"], kp["wcf2"], kp["bcf2"],
                masks)
    in_specs = [act_spec, act_spec, act_spec] + [resident(a) for a in operands[3:]]

    # TODO(synk): for feature maps too large for one per-batch VMEM block, add
    # an H*W tile axis ("arbitrary") with halo taps + pooled-stat accumulators.
    return pl.pallas_call(
        functools.partial(_mlfa_kernel, W=W),
        out_shape=jax.ShapeDtypeStruct((B, OUTC, HW), jnp.float32),
        grid=(B,),
        in_specs=in_specs,
        out_specs=pl.BlockSpec((1, OUTC, HW), lambda b: (b, 0, 0)),
        compiler_params=pltpu.CompilerParams(
            dimension_semantics=("parallel",)),
    )(*operands)


# ----------------------------------------------------------------------------
# Glue: bilinear upsample (matrix form), boundary masks, params, forward
# ----------------------------------------------------------------------------
def _interp_matrix(n_in, n_out):
    """(n_out, n_in) bilinear interpolation matrix, align_corners=True."""
    f32 = jnp.float32
    if n_in == 1:
        return jnp.ones((n_out, 1), f32)
    if n_out == 1:
        return jnp.zeros((1, n_in), f32).at[0, 0].set(1.0)
    src = jnp.linspace(0.0, float(n_in - 1), n_out, dtype=f32)
    i0 = jnp.clip(jnp.floor(src).astype(jnp.int32), 0, n_in - 1)
    i1 = jnp.minimum(i0 + 1, n_in - 1)
    frac = src - i0.astype(f32)
    cols = jnp.arange(n_in, dtype=jnp.int32)[None, :]
    m = ((1.0 - frac)[:, None] * (cols == i0[:, None]).astype(f32)
         + frac[:, None] * (cols == i1[:, None]).astype(f32))
    return m


def bilinear_resize_ac(x, out_hw):
    """Bilinear upsample, align_corners=True, NCHW — gather-free (two einsums).
    # TODO(synk): fuse the fixed-ratio upsample matmuls into the Pallas kernel.
    """
    _, _, H, W = x.shape
    OH, OW = out_hw
    my = _interp_matrix(H, OH)                          # (OH, H)
    mx = _interp_matrix(W, OW)                          # (OW, W)
    y = jnp.einsum('oh,bchw->bcow', my, x)
    y = jnp.einsum('pw,bcow->bcop', mx, y)
    return y


def _conv3x3_boundary_masks(H, W):
    """(9, H*W) 0/1 masks: validity of tap (dy,dx) at each flattened position."""
    m = jnp.arange(H * W, dtype=jnp.int32)
    h, w = m // W, m % W
    rows = []
    for dy in (-1, 0, 1):
        for dx in (-1, 0, 1):
            valid = ((h + dy >= 0) & (h + dy < H) & (w + dx >= 0) & (w + dx < W))
            rows.append(valid.astype(jnp.float32))
    return jnp.stack(rows, axis=0)


def _bn_fold(key, c, eps=1e-5):
    k1, k2, k3, k4 = jax.random.split(key, 4)
    gamma = 1.0 + 0.2 * jax.random.normal(k1, (c,), jnp.float32)
    beta = 0.1 * jax.random.normal(k2, (c,), jnp.float32)
    mean = 0.1 * jax.random.normal(k3, (c,), jnp.float32)
    var = jax.random.uniform(k4, (c,), jnp.float32, 0.5, 1.5)
    scale = gamma / jnp.sqrt(var + eps)
    bias = beta - mean * scale
    return scale, bias


def init_params(key, C, OUTC):
    ks = jax.random.split(key, 12)

    def w(k, shape, fan_in):
        return jax.random.normal(k, shape, jnp.float32) * jnp.sqrt(2.0 / fan_in)

    p = {}
    # fusion: Conv2d(3C -> C, 1x1, no bias) + BN(C)  (reused twice in forward)
    p["fus_w"] = w(ks[0], (3 * C, C), 3 * C)
    p["fus_s"], p["fus_b"] = _bn_fold(ks[1], C)
    # spa_attention: Conv2d(C -> 1, 1x1) + BN(1) + Sigmoid
    p["spa_w"] = w(ks[2], (C, 1), C)
    p["spa_s"], p["spa_b"] = _bn_fold(ks[3], 1)
    # weight_level: Conv2d(C -> 4, 1x1) + BN(4) + Dropout2d (eval = identity)
    p["wl_w"] = w(ks[4], (C, 4), C)
    p["wl_s"], p["wl_b"] = _bn_fold(ks[5], 4)
    # selectattention: Conv2d(8 -> 4, 1x1) + BN(4) + Softmax(dim=1)
    p["sel_w"] = w(ks[6], (8, 4), 8)
    p["sel_s"], p["sel_b"] = _bn_fold(ks[7], 4)
    # ConcateFusion: Conv2d(2C -> C, 3x3, pad 1) + BN + ReLU + Dropout
    #                + Conv2d(C -> OUTC, 1x1) + BN
    p["cf1_w"] = w(ks[8], (3, 3, 2 * C, C), 2 * C * 9)
    p["cf1_s"], p["cf1_b"] = _bn_fold(ks[9], C)
    p["cf2_w"] = w(ks[10], (C, OUTC), C)
    p["cf2_s"], p["cf2_b"] = _bn_fold(ks[11], OUTC)
    return p


def _fold_operands(p, C, OUTC):
    """Transpose to (Cout, Cin), fold BN scales into weights, pre-compose the
    weight_level->selectattention chain, cast MXU operands to bf16; biases and
    the tiny pooled-stat matrices stay f32."""
    f32, bf16 = jnp.float32, jnp.bfloat16
    # fusion 1x1 (3C->C) split into three per-level (C,C) blocks, BN-scaled.
    wf_t = p["fus_w"].T * p["fus_s"][:, None]                         # (C, 3C)
    wf = jnp.stack([wf_t[:, 0:C], wf_t[:, C:2 * C], wf_t[:, 2 * C:3 * C]],
                   axis=0).astype(bf16)                               # (3, C, C)
    # weight_level + selectattention (+ BNs) composed into A, B, c:
    #   s = A @ avg + B @ max + c
    wwl = p["wl_w"].T * p["wl_s"][:, None]                            # (4, C)
    bwl = p["wl_b"].reshape(4, 1)
    wsel = p["sel_w"].T * p["sel_s"][:, None]                         # (4, 8)
    bsel = p["sel_b"].reshape(4, 1)
    wlA = (wsel[:, :4] @ wwl).astype(f32)                             # (4, C)
    wlB = (wsel[:, 4:] @ wwl).astype(f32)                             # (4, C)
    wlc = ((wsel[:, :4] + wsel[:, 4:]) @ bwl + bsel).astype(f32)      # (4, 1)
    return dict(
        wf=wf,
        bfus=p["fus_b"].reshape(C, 1).astype(f32),
        wspa=(p["spa_w"].T * p["spa_s"][:, None]).astype(bf16),       # (1, C)
        bspa=p["spa_b"].reshape(1, 1).astype(f32),
        wlA=wlA, wlB=wlB, wlc=wlc,
        wcf1=(jnp.transpose(p["cf1_w"], (3, 0, 1, 2)).reshape(C, 9 * 2 * C)
              * p["cf1_s"][:, None]).astype(bf16),                    # (C, 18C)
        bcf1=p["cf1_b"].reshape(C, 1).astype(f32),
        wcf2=(p["cf2_w"].T * p["cf2_s"][:, None]).astype(bf16),       # (OUTC, C)
        bcf2=p["cf2_b"].reshape(OUTC, 1).astype(f32),
    )


@jax.jit
def mlfa_forward(p, x1, x2, x3):
    # NCHW in / NCHW out (PyTorch convention).
    B, C, H, W = x1.shape
    OUTC = p["cf2_w"].shape[1]
    HW = H * W

    x2u = bilinear_resize_ac(x2, (H, W))
    x3u = bilinear_resize_ac(x3, (H, W))

    # Lane-dense layout: (B, C, H*W) with flattened spatial on lanes; bf16
    # halves HBM traffic for the activation inputs (MXU operands).
    x1f = x1.reshape(B, C, HW).astype(jnp.bfloat16)
    x2f = x2u.reshape(B, C, HW).astype(jnp.bfloat16)
    x3f = x3u.reshape(B, C, HW).astype(jnp.bfloat16)

    kp = _fold_operands(p, C, OUTC)
    masks = _conv3x3_boundary_masks(H, W)
    out = _mlfa_pallas(x1f, x2f, x3f, kp, masks, C=C, OUTC=OUTC, H=H, W=W)
    return out.reshape(B, OUTC, H, W)


if __name__ == "__main__":
    key = jax.random.PRNGKey(0)
    B, C, H, W = 2, 4, 16, 16
    OUTC = 4
    k0, k1, k2, k3 = jax.random.split(key, 4)
    # Multi-level features: x2, x3 at coarser resolutions (upsampled in forward)
    x1 = jax.random.normal(k0, (B, C, H, W), jnp.float32)
    x2 = jax.random.normal(k1, (B, C, H // 2, W // 2), jnp.float32)
    x3 = jax.random.normal(k2, (B, C, H // 4, W // 4), jnp.float32)

    params = init_params(k3, C, OUTC)
    out = mlfa_forward(params, x1, x2, x3)
    out = jax.block_until_ready(out)
    assert out.shape == (B, OUTC, H, W), out.shape
    assert bool(jnp.all(jnp.isfinite(out)))
    print("KERNEL_OK")
</pallas_src>

<mosaic_0001>
module attributes {stable_mosaic.version = 11 : i64} {
  func.func @_mlfa_kernel(%arg0: i32, %arg1: memref<1x4x256xbf16, #tpu.memory_space<vmem>>, %arg2: memref<1x4x256xbf16, #tpu.memory_space<vmem>>, %arg3: memref<1x4x256xbf16, #tpu.memory_space<vmem>>, %arg4: memref<3x4x4xbf16, #tpu.memory_space<vmem>>, %arg5: memref<4x1xf32, #tpu.memory_space<vmem>>, %arg6: memref<1x4xbf16, #tpu.memory_space<vmem>>, %arg7: memref<1x1xf32, #tpu.memory_space<vmem>>, %arg8: memref<4x4xf32, #tpu.memory_space<vmem>>, %arg9: memref<4x4xf32, #tpu.memory_space<vmem>>, %arg10: memref<4x1xf32, #tpu.memory_space<vmem>>, %arg11: memref<4x72xbf16, #tpu.memory_space<vmem>>, %arg12: memref<4x1xf32, #tpu.memory_space<vmem>>, %arg13: memref<4x4xbf16, #tpu.memory_space<vmem>>, %arg14: memref<4x1xf32, #tpu.memory_space<vmem>>, %arg15: memref<9x256xf32, #tpu.memory_space<vmem>>, %arg16: memref<1x4x256xf32, #tpu.memory_space<vmem>>) attributes {dimension_semantics = [#tpu.dimension_semantics<parallel>], iteration_bounds = array<i64: 2>, scalar_prefetch = 0 : i64, scratch_operands = 0 : i64, tpu.core_type = #tpu.core_type<tc>, window_params = [{transform_indices = @transform_0, window_bounds = array<i64: 1, 4, 256>}, {transform_indices = @transform_1, window_bounds = array<i64: 1, 4, 256>}, {transform_indices = @transform_2, window_bounds = array<i64: 1, 4, 256>}, {pipeline_mode = #tpu.pipeline_mode<synchronous>, transform_indices = @transform_3, window_bounds = array<i64: 3, 4, 4>}, {pipeline_mode = #tpu.pipeline_mode<synchronous>, transform_indices = @transform_4, window_bounds = array<i64: 4, 1>}, {pipeline_mode = #tpu.pipeline_mode<synchronous>, transform_indices = @transform_5, window_bounds = array<i64: 1, 4>}, {pipeline_mode = #tpu.pipeline_mode<synchronous>, transform_indices = @transform_6, window_bounds = array<i64: 1, 1>}, {pipeline_mode = #tpu.pipeline_mode<synchronous>, transform_indices = @transform_7, window_bounds = array<i64: 4, 4>}, {pipeline_mode = #tpu.pipeline_mode<synchronous>, transform_indices = @transform_8, window_bounds = array<i64: 4, 4>}, {pipeline_mode = #tpu.pipeline_mode<synchronous>, transform_indices = @transform_9, window_bounds = array<i64: 4, 1>}, {pipeline_mode = #tpu.pipeline_mode<synchronous>, transform_indices = @transform_10, window_bounds = array<i64: 4, 72>}, {pipeline_mode = #tpu.pipeline_mode<synchronous>, transform_indices = @transform_11, window_bounds = array<i64: 4, 1>}, {pipeline_mode = #tpu.pipeline_mode<synchronous>, transform_indices = @transform_12, window_bounds = array<i64: 4, 4>}, {pipeline_mode = #tpu.pipeline_mode<synchronous>, transform_indices = @transform_13, window_bounds = array<i64: 4, 1>}, {pipeline_mode = #tpu.pipeline_mode<synchronous>, transform_indices = @transform_14, window_bounds = array<i64: 9, 256>}, {transform_indices = @transform_15, window_bounds = array<i64: 1, 4, 256>}]} {
    %c0 = arith.constant 0 : index
    %c0_0 = arith.constant 0 : index
    %c0_1 = arith.constant 0 : index
    %0 = vector.load %arg1[%c0, %c0_0, %c0_1] : memref<1x4x256xbf16, #tpu.memory_space<vmem>>, vector<1x4x256xbf16>
    %1 = vector.shape_cast %0 : vector<1x4x256xbf16> to vector<4x256xbf16>
    %c0_2 = arith.constant 0 : index
    %c0_3 = arith.constant 0 : index
    %c0_4 = arith.constant 0 : index
    %2 = vector.load %arg2[%c0_2, %c0_3, %c0_4] : memref<1x4x256xbf16, #tpu.memory_space<vmem>>, vector<1x4x256xbf16>
    %3 = vector.shape_cast %2 : vector<1x4x256xbf16> to vector<4x256xbf16>
    %c0_5 = arith.constant 0 : index
    %c0_6 = arith.constant 0 : index
    %c0_7 = arith.constant 0 : index
    %4 = vector.load %arg3[%c0_5, %c0_6, %c0_7] : memref<1x4x256xbf16, #tpu.memory_space<vmem>>, vector<1x4x256xbf16>
    %5 = vector.shape_cast %4 : vector<1x4x256xbf16> to vector<4x256xbf16>
    %c0_8 = arith.constant 0 : index
    %c0_9 = arith.constant 0 : index
    %c0_10 = arith.constant 0 : index
    %6 = vector.load %arg4[%c0_8, %c0_9, %c0_10] : memref<3x4x4xbf16, #tpu.memory_space<vmem>>, vector<1x4x4xbf16>
    %7 = vector.shape_cast %6 : vector<1x4x4xbf16> to vector<4x4xbf16>
    %c1 = arith.constant 1 : index
    %c0_11 = arith.constant 0 : index
    %c0_12 = arith.constant 0 : index
    %8 = vector.load %arg4[%c1, %c0_11, %c0_12] : memref<3x4x4xbf16, #tpu.memory_space<vmem>>, vector<1x4x4xbf16>
    %9 = vector.shape_cast %8 : vector<1x4x4xbf16> to vector<4x4xbf16>
    %c2 = arith.constant 2 : index
    %c0_13 = arith.constant 0 : index
    %c0_14 = arith.constant 0 : index
    %10 = vector.load %arg4[%c2, %c0_13, %c0_14] : memref<3x4x4xbf16, #tpu.memory_space<vmem>>, vector<1x4x4xbf16>
    %11 = vector.shape_cast %10 : vector<1x4x4xbf16> to vector<4x4xbf16>
    %c0_15 = arith.constant 0 : index
    %c0_16 = arith.constant 0 : index
    %12 = vector.load %arg5[%c0_15, %c0_16] : memref<4x1xf32, #tpu.memory_space<vmem>>, vector<4x1xf32>
    %cst = arith.constant dense<0.000000e+00> : vector<4x256xf32>
    %13 = tpu.matmul %7, %1, %cst {dimension_numbers = #tpu.dot_dimension_numbers<[1], [0], [0], [1], [0, 0, 1, 1], [], []>} : vector<4x4xbf16>, vector<4x256xbf16>, vector<4x256xf32> -> vector<4x256xf32>
    %cst_17 = arith.constant dense<0.000000e+00> : vector<4x256xf32>
    %14 = tpu.matmul %9, %3, %cst_17 {dimension_numbers = #tpu.dot_dimension_numbers<[1], [0], [0], [1], [0, 0, 1, 1], [], []>} : vector<4x4xbf16>, vector<4x256xbf16>, vector<4x256xf32> -> vector<4x256xf32>
    %15 = arith.addf %13, %14 : vector<4x256xf32>
    %cst_18 = arith.constant dense<0.000000e+00> : vector<4x256xf32>
    %16 = tpu.matmul %11, %5, %cst_18 {dimension_numbers = #tpu.dot_dimension_numbers<[1], [0], [0], [1], [0, 0, 1, 1], [], []>} : vector<4x4xbf16>, vector<4x256xbf16>, vector<4x256xf32> -> vector<4x256xf32>
    %17 = arith.addf %15, %16 : vector<4x256xf32>
    %18 = vector.broadcast %12 : vector<4x1xf32> to vector<4x256xf32>
    %19 = arith.addf %17, %18 : vector<4x256xf32>
    %20 = arith.truncf %19 : vector<4x256xf32> to vector<4x256xbf16>
    %c0_19 = arith.constant 0 : index
    %c0_20 = arith.constant 0 : index
    %21 = vector.load %arg6[%c0_19, %c0_20] : memref<1x4xbf16, #tpu.memory_space<vmem>>, vector<1x4xbf16>
    %cst_21 = arith.constant dense<0.000000e+00> : vector<1x256xf32>
    %22 = tpu.matmul %21, %20, %cst_21 {dimension_numbers = #tpu.dot_dimension_numbers<[1], [0], [0], [1], [0, 0, 1, 1], [], []>} : vector<1x4xbf16>, vector<4x256xbf16>, vector<1x256xf32> -> vector<1x256xf32>
    %c0_22 = arith.constant 0 : index
    %c0_23 = arith.constant 0 : index
    %23 = vector.load %arg7[%c0_22, %c0_23] : memref<1x1xf32, #tpu.memory_space<vmem>>, vector<1x1xf32>
    %24 = vector.broadcast %23 : vector<1x1xf32> to vector<1x256xf32>
    %25 = arith.addf %22, %24 : vector<1x256xf32>
    %26 = arith.negf %25 : vector<1x256xf32>
    %27 = math.exp %26 : vector<1x256xf32>
    %cst_24 = arith.constant 1.000000e+00 : f32
    %28 = vector.broadcast %cst_24 : f32 to vector<1x256xf32>
    %29 = arith.addf %28, %27 : vector<1x256xf32>
    %30 = arith.divf %28, %29 : vector<1x256xf32>
    %cst_25 = arith.constant dense<0.000000e+00> : vector<4xf32>
    %31 = vector.multi_reduction <add>, %19, %cst_25 [1] : vector<4x256xf32> to vector<4xf32>
    %32 = vector.shape_cast %31 : vector<4xf32> to vector<4x1xf32>
    %cst_26 = arith.constant 2.560000e+02 : f32
    %33 = vector.broadcast %cst_26 : f32 to vector<4x1xf32>
    %34 = arith.divf %32, %33 : vector<4x1xf32>
    %cst_27 = arith.constant dense<0xFF800000> : vector<4xf32>
    %35 = vector.multi_reduction <maximumf>, %19, %cst_27 [1] : vector<4x256xf32> to vector<4xf32>
    %36 = vector.shape_cast %35 : vector<4xf32> to vector<4x1xf32>
    %c0_28 = arith.constant 0 : index
    %c0_29 = arith.constant 0 : index
    %37 = vector.load %arg8[%c0_28, %c0_29] : memref<4x4xf32, #tpu.memory_space<vmem>>, vector<4x4xf32>
    %cst_30 = arith.constant dense<0.000000e+00> : vector<4x1xf32>
    %38 = tpu.matmul %37, %34, %cst_30 {dimension_numbers = #tpu.dot_dimension_numbers<[1], [0], [0], [1], [0, 0, 1, 1], [], []>} : vector<4x4xf32>, vector<4x1xf32>, vector<4x1xf32> -> vector<4x1xf32>
    %c0_31 = arith.constant 0 : index
    %c0_32 = arith.constant 0 : index
    %39 = vector.load %arg9[%c0_31, %c0_32] : memref<4x4xf32, #tpu.memory_space<vmem>>, vector<4x4xf32>
    %cst_33 = arith.constant dense<0.000000e+00> : vector<4x1xf32>
    %40 = tpu.matmul %39, %36, %cst_33 {dimension_numbers = #tpu.dot_dimension_numbers<[1], [0], [0], [1], [0, 0, 1, 1], [], []>} : vector<4x4xf32>, vector<4x1xf32>, vector<4x1xf32> -> vector<4x1xf32>
    %41 = arith.addf %38, %40 : vector<4x1xf32>
    %c0_34 = arith.constant 0 : index
    %c0_35 = arith.constant 0 : index
    %42 = vector.load %arg10[%c0_34, %c0_35] : memref<4x1xf32, #tpu.memory_space<vmem>>, vector<4x1xf32>
    %43 = arith.addf %41, %42 : vector<4x1xf32>
    %44 = vector.extract_strided_slice %43 {offsets = [0, 0], sizes = [1, 1], strides = [1, 1]} : vector<4x1xf32> to vector<1x1xf32>
    %45 = vector.extract_strided_slice %43 {offsets = [1, 0], sizes = [1, 1], strides = [1, 1]} : vector<4x1xf32> to vector<1x1xf32>
    %46 = arith.maximumf %44, %45 : vector<1x1xf32>
    %47 = vector.extract_strided_slice %43 {offsets = [2, 0], sizes = [1, 1], strides = [1, 1]} : vector<4x1xf32> to vector<1x1xf32>
    %48 = vector.extract_strided_slice %43 {offsets = [3, 0], sizes = [1, 1], strides = [1, 1]} : vector<4x1xf32> to vector<1x1xf32>
    %49 = arith.maximumf %47, %48 : vector<1x1xf32>
    %50 = arith.maximumf %46, %49 : vector<1x1xf32>
    %51 = vector.broadcast %50 : vector<1x1xf32> to vector<4x1xf32>
    %52 = arith.subf %43, %51 : vector<4x1xf32>
    %53 = math.exp %52 : vector<4x1xf32>
    %54 = vector.extract_strided_slice %53 {offsets = [0, 0], sizes = [1, 1], strides = [1, 1]} : vector<4x1xf32> to vector<1x1xf32>
    %55 = vector.extract_strided_slice %53 {offsets = [1, 0], sizes = [1, 1], strides = [1, 1]} : vector<4x1xf32> to vector<1x1xf32>
    %56 = arith.addf %54, %55 : vector<1x1xf32>
    %57 = vector.extract_strided_slice %53 {offsets = [2, 0], sizes = [1, 1], strides = [1, 1]} : vector<4x1xf32> to vector<1x1xf32>
    %58 = arith.addf %56, %57 : vector<1x1xf32>
    %59 = vector.extract_strided_slice %53 {offsets = [3, 0], sizes = [1, 1], strides = [1, 1]} : vector<4x1xf32> to vector<1x1xf32>
    %60 = arith.addf %58, %59 : vector<1x1xf32>
    %61 = vector.broadcast %60 : vector<1x1xf32> to vector<4x1xf32>
    %62 = arith.divf %53, %61 : vector<4x1xf32>
    %63 = vector.extract_strided_slice %62 {offsets = [0, 0], sizes = [1, 1], strides = [1, 1]} : vector<4x1xf32> to vector<1x1xf32>
    %64 = arith.extf %1 : vector<4x256xbf16> to vector<4x256xf32>
    %65 = vector.broadcast %30 : vector<1x256xf32> to vector<4x256xf32>
    %66 = arith.mulf %64, %65 : vector<4x256xf32>
    %67 = arith.truncf %66 : vector<4x256xf32> to vector<4x256xbf16>
    %cst_36 = arith.constant dense<0.000000e+00> : vector<4x256xf32>
    %68 = tpu.matmul %7, %67, %cst_36 {dimension_numbers = #tpu.dot_dimension_numbers<[1], [0], [0], [1], [0, 0, 1, 1], [], []>} : vector<4x4xbf16>, vector<4x256xbf16>, vector<4x256xf32> -> vector<4x256xf32>
    %69 = vector.broadcast %63 : vector<1x1xf32> to vector<4x256xf32>
    %70 = arith.mulf %69, %68 : vector<4x256xf32>
    %71 = vector.extract_strided_slice %62 {offsets = [1, 0], sizes = [1, 1], strides = [1, 1]} : vector<4x1xf32> to vector<1x1xf32>
    %72 = arith.extf %3 : vector<4x256xbf16> to vector<4x256xf32>
    %73 = vector.broadcast %30 : vector<1x256xf32> to vector<4x256xf32>
    %74 = arith.mulf %72, %73 : vector<4x256xf32>
    %75 = arith.truncf %74 : vector<4x256xf32> to vector<4x256xbf16>
    %cst_37 = arith.constant dense<0.000000e+00> : vector<4x256xf32>
    %76 = tpu.matmul %9, %75, %cst_37 {dimension_numbers = #tpu.dot_dimension_numbers<[1], [0], [0], [1], [0, 0, 1, 1], [], []>} : vector<4x4xbf16>, vector<4x256xbf16>, vector<4x256xf32> -> vector<4x256xf32>
    %77 = vector.broadcast %71 : vector<1x1xf32> to vector<4x256xf32>
    %78 = arith.mulf %77, %76 : vector<4x256xf32>
    %79 = arith.addf %70, %78 : vector<4x256xf32>
    %80 = vector.extract_strided_slice %62 {offsets = [2, 0], sizes = [1, 1], strides = [1, 1]} : vector<4x1xf32> to vector<1x1xf32>
    %81 = arith.extf %5 : vector<4x256xbf16> to vector<4x256xf32>
    %82 = vector.broadcast %30 : vector<1x256xf32> to vector<4x256xf32>
    %83 = arith.mulf %81, %82 : vector<4x256xf32>
    %84 = arith.truncf %83 : vector<4x256xf32> to vector<4x256xbf16>
    %cst_38 = arith.constant dense<0.000000e+00> : vector<4x256xf32>
    %85 = tpu.matmul %11, %84, %cst_38 {dimension_numbers = #tpu.dot_dimension_numbers<[1], [0], [0], [1], [0, 0, 1, 1], [], []>} : vector<4x4xbf16>, vector<4x256xbf16>, vector<4x256xf32> -> vector<4x256xf32>
    %86 = vector.broadcast %80 : vector<1x1xf32> to vector<4x256xf32>
    %87 = arith.mulf %86, %85 : vector<4x256xf32>
    %88 = arith.addf %79, %87 : vector<4x256xf32>
    %89 = vector.broadcast %12 : vector<4x1xf32> to vector<4x256xf32>
    %90 = arith.addf %88, %89 : vector<4x256xf32>
    %91 = tpu.concatenate %19, %90 in 0 : vector<4x256xf32>, vector<4x256xf32> -> vector<8x256xf32>
    %c0_39 = arith.constant 0 : index
    %c0_40 = arith.constant 0 : index
    %92 = vector.load %arg15[%c0_39, %c0_40] : memref<9x256xf32, #tpu.memory_space<vmem>>, vector<9x256xf32>
    %c17_i32 = arith.constant 17 : i32
    %93 = tpu.dynamic_rotate %91 by %c17_i32 dim 1 : vector<8x256xf32>, i32 -> vector<8x256xf32>
    %94 = vector.extract_strided_slice %92 {offsets = [0, 0], sizes = [1, 256], strides = [1, 1]} : vector<9x256xf32> to vector<1x256xf32>
    %95 = vector.broadcast %94 : vector<1x256xf32> to vector<8x256xf32>
    %96 = arith.mulf %93, %95 : vector<8x256xf32>
    %c16_i32 = arith.constant 16 : i32
    %97 = tpu.dynamic_rotate %91 by %c16_i32 dim 1 : vector<8x256xf32>, i32 -> vector<8x256xf32>
    %98 = vector.extract_strided_slice %92 {offsets = [1, 0], sizes = [1, 256], strides = [1, 1]} : vector<9x256xf32> to vector<1x256xf32>
    %99 = vector.broadcast %98 : vector<1x256xf32> to vector<8x256xf32>
    %100 = arith.mulf %97, %99 : vector<8x256xf32>
    %c15_i32 = arith.constant 15 : i32
    %101 = tpu.dynamic_rotate %91 by %c15_i32 dim 1 : vector<8x256xf32>, i32 -> vector<8x256xf32>
    %102 = vector.extract_strided_slice %92 {offsets = [2, 0], sizes = [1, 256], strides = [1, 1]} : vector<9x256xf32> to vector<1x256xf32>
    %103 = vector.broadcast %102 : vector<1x256xf32> to vector<8x256xf32>
    %104 = arith.mulf %101, %103 : vector<8x256xf32>
    %c1_i32 = arith.constant 1 : i32
    %105 = tpu.dynamic_rotate %91 by %c1_i32 dim 1 : vector<8x256xf32>, i32 -> vector<8x256xf32>
    %106 = vector.extract_strided_slice %92 {offsets = [3, 0], sizes = [1, 256], strides = [1, 1]} : vector<9x256xf32> to vector<1x256xf32>
    %107 = vector.broadcast %106 : vector<1x256xf32> to vector<8x256xf32>
    %108 = arith.mulf %105, %107 : vector<8x256xf32>
    %c255_i32 = arith.constant 255 : i32
    %109 = tpu.dynamic_rotate %91 by %c255_i32 dim 1 : vector<8x256xf32>, i32 -> vector<8x256xf32>
    %110 = vector.extract_strided_slice %92 {offsets = [5, 0], sizes = [1, 256], strides = [1, 1]} : vector<9x256xf32> to vector<1x256xf32>
    %111 = vector.broadcast %110 : vector<1x256xf32> to vector<8x256xf32>
    %112 = arith.mulf %109, %111 : vector<8x256xf32>
    %c241_i32 = arith.constant 241 : i32
    %113 = tpu.dynamic_rotate %91 by %c241_i32 dim 1 : vector<8x256xf32>, i32 -> vector<8x256xf32>
    %114 = vector.extract_strided_slice %92 {offsets = [6, 0], sizes = [1, 256], strides = [1, 1]} : vector<9x256xf32> to vector<1x256xf32>
    %115 = vector.broadcast %114 : vector<1x256xf32> to vector<8x256xf32>
    %116 = arith.mulf %113, %115 : vector<8x256xf32>
    %c240_i32 = arith.constant 240 : i32
    %117 = tpu.dynamic_rotate %91 by %c240_i32 dim 1 : vector<8x256xf32>, i32 -> vector<8x256xf32>
    %118 = vector.extract_strided_slice %92 {offsets = [7, 0], sizes = [1, 256], strides = [1, 1]} : vector<9x256xf32> to vector<1x256xf32>
    %119 = vector.broadcast %118 : vector<1x256xf32> to vector<8x256xf32>
    %120 = arith.mulf %117, %119 : vector<8x256xf32>
    %c239_i32 = arith.constant 239 : i32
    %121 = tpu.dynamic_rotate %91 by %c239_i32 dim 1 : vector<8x256xf32>, i32 -> vector<8x256xf32>
    %122 = vector.extract_strided_slice %92 {offsets = [8, 0], sizes = [1, 256], strides = [1, 1]} : vector<9x256xf32> to vector<1x256xf32>
    %123 = vector.broadcast %122 : vector<1x256xf32> to vector<8x256xf32>
    %124 = arith.mulf %121, %123 : vector<8x256xf32>
    %125 = tpu.concatenate %96, %100, %104, %108, %91, %112, %116, %120, %124 in 0 : vector<8x256xf32>, vector<8x256xf32>, vector<8x256xf32>, vector<8x256xf32>, vector<8x256xf32>, vector<8x256xf32>, vector<8x256xf32>, vector<8x256xf32>, vector<8x256xf32> -> vector<72x256xf32>
    %126 = arith.truncf %125 : vector<72x256xf32> to vector<72x256xbf16>
    %c0_41 = arith.constant 0 : index
    %c0_42 = arith.constant 0 : index
    %127 = vector.load %arg11[%c0_41, %c0_42] : memref<4x72xbf16, #tpu.memory_space<vmem>>, vector<4x72xbf16>
    %cst_43 = arith.constant dense<0.000000e+00> : vector<4x256xf32>
    %128 = tpu.matmul %127, %126, %cst_43 {dimension_numbers = #tpu.dot_dimension_numbers<[1], [0], [0], [1], [0, 0, 1, 1], [], []>} : vector<4x72xbf16>, vector<72x256xbf16>, vector<4x256xf32> -> vector<4x256xf32>
    %c0_44 = arith.constant 0 : index
    %c0_45 = arith.constant 0 : index
    %129 = vector.load %arg12[%c0_44, %c0_45] : memref<4x1xf32, #tpu.memory_space<vmem>>, vector<4x1xf32>
    %130 = vector.broadcast %129 : vector<4x1xf32> to vector<4x256xf32>
    %131 = arith.addf %128, %130 : vector<4x256xf32>
    %cst_46 = arith.constant 0.000000e+00 : f32
    %132 = vector.broadcast %cst_46 : f32 to vector<4x256xf32>
    %133 = arith.maximumf %131, %132 : vector<4x256xf32>
    %134 = arith.truncf %133 : vector<4x256xf32> to vector<4x256xbf16>
    %c0_47 = arith.constant 0 : index
    %c0_48 = arith.constant 0 : index
    %135 = vector.load %arg13[%c0_47, %c0_48] : memref<4x4xbf16, #tpu.memory_space<vmem>>, vector<4x4xbf16>
    %cst_49 = arith.constant dense<0.000000e+00> : vector<4x256xf32>
    %136 = tpu.matmul %135, %134, %cst_49 {dimension_numbers = #tpu.dot_dimension_numbers<[1], [0], [0], [1], [0, 0, 1, 1], [], []>} : vector<4x4xbf16>, vector<4x256xbf16>, vector<4x256xf32> -> vector<4x256xf32>
    %c0_50 = arith.constant 0 : index
    %c0_51 = arith.constant 0 : index
    %137 = vector.load %arg14[%c0_50, %c0_51] : memref<4x1xf32, #tpu.memory_space<vmem>>, vector<4x1xf32>
    %138 = vector.broadcast %137 : vector<4x1xf32> to vector<4x256xf32>
    %139 = arith.addf %136, %138 : vector<4x256xf32>
    %c0_52 = arith.constant 0 : index
    %c0_53 = arith.constant 0 : index
    %c0_54 = arith.constant 0 : index
    %140 = vector.load %arg16[%c0_52, %c0_53, %c0_54] : memref<1x4x256xf32, #tpu.memory_space<vmem>>, vector<1x4x256xf32>
    %141 = vector.shape_cast %140 : vector<1x4x256xf32> to vector<4x256xf32>
    %142 = vector.shape_cast %139 : vector<4x256xf32> to vector<1x4x256xf32>
    tpu.vector_store %arg16[%c0_52, %c0_53, %c0_54], %142 {strides = array<i32>} : memref<1x4x256xf32, #tpu.memory_space<vmem>>, vector<1x4x256xf32>,
    return
  }
  func.func @transform_0(%arg0: i32) -> (i32, i32, i32) {
    %c0_i32 = arith.constant 0 : i32
    %c0_i32_0 = arith.constant 0 : i32
    %c0_i32_1 = arith.constant 0 : i32
    return %arg0, %c0_i32, %c0_i32_0 : i32, i32, i32
  }
  func.func @transform_1(%arg0: i32) -> (i32, i32, i32) {
    %c0_i32 = arith.constant 0 : i32
    %c0_i32_0 = arith.constant 0 : i32
    %c0_i32_1 = arith.constant 0 : i32
    return %arg0, %c0_i32, %c0_i32_0 : i32, i32, i32
  }
  func.func @transform_2(%arg0: i32) -> (i32, i32, i32) {
    %c0_i32 = arith.constant 0 : i32
    %c0_i32_0 = arith.constant 0 : i32
    %c0_i32_1 = arith.constant 0 : i32
    return %arg0, %c0_i32, %c0_i32_0 : i32, i32, i32
  }
  func.func @transform_3(%arg0: i32) -> (i32, i32, i32) {
    %c0_i32 = arith.constant 0 : i32
    %c0_i32_0 = arith.constant 0 : i32
    %c0_i32_1 = arith.constant 0 : i32
    %c0_i32_2 = arith.constant 0 : i32
    return %c0_i32, %c0_i32_0, %c0_i32_1 : i32, i32, i32
  }
  func.func @transform_4(%arg0: i32) -> (i32, i32) {
    %c0_i32 = arith.constant 0 : i32
    %c0_i32_0 = arith.constant 0 : i32
    %c0_i32_1 = arith.constant 0 : i32
    return %c0_i32, %c0_i32_0 : i32, i32
  }
  func.func @transform_5(%arg0: i32) -> (i32, i32) {
    %c0_i32 = arith.constant 0 : i32
    %c0_i32_0 = arith.constant 0 : i32
    %c0_i32_1 = arith.constant 0 : i32
    return %c0_i32, %c0_i32_0 : i32, i32
  }
  func.func @transform_6(%arg0: i32) -> (i32, i32) {
    %c0_i32 = arith.constant 0 : i32
    %c0_i32_0 = arith.constant 0 : i32
    %c0_i32_1 = arith.constant 0 : i32
    return %c0_i32, %c0_i32_0 : i32, i32
  }
  func.func @transform_7(%arg0: i32) -> (i32, i32) {
    %c0_i32 = arith.constant 0 : i32
    %c0_i32_0 = arith.constant 0 : i32
    %c0_i32_1 = arith.constant 0 : i32
    return %c0_i32, %c0_i32_0 : i32, i32
  }
  func.func @transform_8(%arg0: i32) -> (i32, i32) {
    %c0_i32 = arith.constant 0 : i32
    %c0_i32_0 = arith.constant 0 : i32
    %c0_i32_1 = arith.constant 0 : i32
    return %c0_i32, %c0_i32_0 : i32, i32
  }
  func.func @transform_9(%arg0: i32) -> (i32, i32) {
    %c0_i32 = arith.constant 0 : i32
    %c0_i32_0 = arith.constant 0 : i32
    %c0_i32_1 = arith.constant 0 : i32
    return %c0_i32, %c0_i32_0 : i32, i32
  }
  func.func @transform_10(%arg0: i32) -> (i32, i32) {
    %c0_i32 = arith.constant 0 : i32
    %c0_i32_0 = arith.constant 0 : i32
    %c0_i32_1 = arith.constant 0 : i32
    return %c0_i32, %c0_i32_0 : i32, i32
  }
  func.func @transform_11(%arg0: i32) -> (i32, i32) {
    %c0_i32 = arith.constant 0 : i32
    %c0_i32_0 = arith.constant 0 : i32
    %c0_i32_1 = arith.constant 0 : i32
    return %c0_i32, %c0_i32_0 : i32, i32
  }
  func.func @transform_12(%arg0: i32) -> (i32, i32) {
    %c0_i32 = arith.constant 0 : i32
    %c0_i32_0 = arith.constant 0 : i32
    %c0_i32_1 = arith.constant 0 : i32
    return %c0_i32, %c0_i32_0 : i32, i32
  }
  func.func @transform_13(%arg0: i32) -> (i32, i32) {
    %c0_i32 = arith.constant 0 : i32
    %c0_i32_0 = arith.constant 0 : i32
    %c0_i32_1 = arith.constant 0 : i32
    return %c0_i32, %c0_i32_0 : i32, i32
  }
  func.func @transform_14(%arg0: i32) -> (i32, i32) {
    %c0_i32 = arith.constant 0 : i32
    %c0_i32_0 = arith.constant 0 : i32
    %c0_i32_1 = arith.constant 0 : i32
    return %c0_i32, %c0_i32_0 : i32, i32
  }
  func.func @transform_15(%arg0: i32) -> (i32, i32, i32) {
    %c0_i32 = arith.constant 0 : i32
    %c0_i32_0 = arith.constant 0 : i32
    %c0_i32_1 = arith.constant 0 : i32
    return %arg0, %c0_i32, %c0_i32_0 : i32, i32, i32
  }
}

</mosaic_0001>

<llo_original>
// kernel: mlfa_forward.1
$region0: #{mlfa_forward.1}
  #allocation0 [shape = 'u32[]', space=smem, size = 0x4, offset = 0x4, fixed_abs, tag = 'smem constant byte address 0x4 - core index']
  #allocation1 [shape = 'u32[144,128]{1,0:T(1,128)}', space=vmem, size = 0x12000, scoped, tag = 'internal scratch']
  #allocation2 [shape = 'f32[1,1]{1,0:T(1,128)S(1)}', space=vmem, size = 0x200, scoped, tag = 'scoped memory for mlfa_forward.1']
  %s0 = inlined_call_operand.vmem [shape: bf16[2,4,256], index: 0, kind: input, shape index: {}]
  %s1 = inlined_call_operand.vmem [shape: bf16[2,4,256], index: 1, kind: input, shape index: {}]
  %s2 = inlined_call_operand.vmem [shape: bf16[2,4,256], index: 2, kind: input, shape index: {}]
  %s3 = inlined_call_operand.vmem [shape: bf16[3,4,4], index: 3, kind: input, shape index: {}]
  %s4 = inlined_call_operand.vmem [shape: f32[4,1], index: 4, kind: input, shape index: {}]
  %s5 = inlined_call_operand.vmem [shape: bf16[1,4], index: 5, kind: input, shape index: {}]
  %s6 = inlined_call_operand.<no memory space> [shape: f32[1,1], index: 6, kind: input, shape index: {}]
  %s7 = inlined_call_operand.vmem [shape: f32[4,4], index: 7, kind: input, shape index: {}]
  %s8 = inlined_call_operand.vmem [shape: f32[4,4], index: 8, kind: input, shape index: {}]
  %s9 = inlined_call_operand.vmem [shape: f32[4,1], index: 9, kind: input, shape index: {}]
  %s10 = inlined_call_operand.vmem [shape: bf16[4,72], index: 10, kind: input, shape index: {}]
  %s11 = inlined_call_operand.vmem [shape: f32[4,1], index: 11, kind: input, shape index: {}]
  %s12 = inlined_call_operand.vmem [shape: bf16[4,4], index: 12, kind: input, shape index: {}]
  %s13 = inlined_call_operand.vmem [shape: f32[4,1], index: 13, kind: input, shape index: {}]
  %s14 = inlined_call_operand.vmem [shape: f32[9,256], index: 14, kind: input, shape index: {}]
  %s15 = inlined_call_operand.vmem [shape: f32[2,4,256], index: 15, kind: output, shape index: {}]
  %s16 = sld [smem:[#allocation0]]
  $region93: #{mlfa_forward.1} parent=0
    _
  %s18 = ssub.s32 1, %s16
  %s19 = scalar_select 0, %s18, %s16
  %v20 = vstv %s6
  %21 = vst [vmem:[#allocation2] sm:$0x1] %v20
  loop: start=0, step=1, limit=4
  $region2: #{mlfa_forward.1} parent=0 // loop_pre_header
    _
  $region3: #{mlfa_forward.1} parent=0 // loop_header
    %s23 = sphi 0, %s27
    %p24 = scmp.ge.s32.totalorder %s23, 4
    %s33 = sphi 0, %s35
    %s36 = sphi 0, %s33
    %s37 = sphi 0, %s36
    %s53 = sphi 0, %s37
    %s59 = sphi 0, %s61
    %s62 = sphi 0, %s59
    %s63 = sphi 0, %s62
    %s79 = sphi 0, %s63
    %s85 = sphi 0, %s87
    %s88 = sphi 0, %s85
    %s89 = sphi 0, %s88
    %s105 = sphi 0, %s89
    %s109 = sphi 0, %s109
    %s111 = sphi 0, %s109
    %s112 = sphi 0, %s111
    %s126 = sphi 0, %s112
    %s130 = sphi 0, %s130
    %s132 = sphi 0, %s130
    %s133 = sphi 0, %s132
    %s147 = sphi 0, %s133
    %s151 = sphi 0, %s151
    %s153 = sphi 0, %s151
    %s154 = sphi 0, %s153
    %s168 = sphi 0, %s154
    %s172 = sphi 0, %s172
    %s174 = sphi 0, %s172
    %s175 = sphi 0, %s174
    %s189 = sphi 0, %s175
    %s193 = sphi 0, %s193
    %s195 = sphi 0, %s193
    %s196 = sphi 0, %s195
    %s210 = sphi 0, %s196
    %s214 = sphi 0, %s214
    %s216 = sphi 0, %s214
    %s217 = sphi 0, %s216
    %s231 = sphi 0, %s217
    %s235 = sphi 0, %s235
    %s237 = sphi 0, %s235
    %s238 = sphi 0, %s237
    %s252 = sphi 0, %s238
    %s256 = sphi 0, %s256
    %s258 = sphi 0, %s256
    %s259 = sphi 0, %s258
    %s273 = sphi 0, %s259
    %s277 = sphi 0, %s277
    %s279 = sphi 0, %s277
    %s280 = sphi 0, %s279
    %s294 = sphi 0, %s280
    %s298 = sphi 0, %s298
    %s300 = sphi 0, %s298
    %s301 = sphi 0, %s300
    %s315 = sphi 0, %s301
    %s319 = sphi 0, %s319
    %s321 = sphi 0, %s319
    %s322 = sphi 0, %s321
    %s336 = sphi 0, %s322
    %s340 = sphi 0, %s340
    %s342 = sphi 0, %s340
    %s343 = sphi 0, %s342
    %s357 = sphi 0, %s343
    %s363 = sphi 0, %s365
    %s366 = sphi 0, %s363
    %s367 = sphi 0, %s366
    %s383 = sphi 0, %s367
  $region4: #{mlfa_forward.1} parent=0 // loop_header_branch
    %26 = sbr.rel (%p24) target = $region8
  $region5: #{mlfa_forward.1} parent=0 // loop_body
    %s28 = ssub.s32 %s23, 1
    %s29 = ssub.s32 %s23, 2
    %s30 = sadd.s32 %s23, 1
    %s31 = ssub.s32 %s23, %s30
    %p32 = scmp.eq.s32.totalorder %s31, 0
    %s34 = sadd.s32 %s33, 1
    %s35 = scalar_select %p32, %s33, %s34
    %p38 = pneg %p32
    %p39 = scmp.eq.s32.totalorder %s23, 1
    %p40 = por %p38, %p39
    %p41 = scmp.ne.s32.totalorder %s33, %s36
    %p42 = scmp.eq.s32.totalorder %s23, 0
    %p43 = por %p41, %p42
    %p44 = scmp.ne.s32.totalorder %s33, %s36
    %p45 = scmp.eq.s32.totalorder %s28, 1
    %p46 = por %p44, %p45
    %p47 = scmp.ne.s32.totalorder %s36, %s37
    %p48 = scmp.eq.s32.totalorder %s28, 0
    %p49 = por %p47, %p48
    %p50 = scmp.ne.s32.totalorder %s36, %s37
    %p51 = scmp.eq.s32.totalorder %s29, 1
    %p52 = por %p50, %p51
    %p54 = scmp.ne.s32.totalorder %s37, %s53
    %p55 = scmp.eq.s32.totalorder %s29, 0
    %p56 = por %p54, %p55
    %s57 = ssub.s32 %s23, %s30
    %p58 = scmp.eq.s32.totalorder %s57, 0
    %s60 = sadd.s32 %s59, 1
    %s61 = scalar_select %p58, %s59, %s60
    %p64 = pneg %p58
    %p65 = scmp.eq.s32.totalorder %s23, 1
    %p66 = por %p64, %p65
    %p67 = scmp.ne.s32.totalorder %s59, %s62
    %p68 = scmp.eq.s32.totalorder %s23, 0
    %p69 = por %p67, %p68
    %p70 = scmp.ne.s32.totalorder %s59, %s62
    %p71 = scmp.eq.s32.totalorder %s28, 1
    %p72 = por %p70, %p71
    %p73 = scmp.ne.s32.totalorder %s62, %s63
    %p74 = scmp.eq.s32.totalorder %s28, 0
    %p75 = por %p73, %p74
    %p76 = scmp.ne.s32.totalorder %s62, %s63
    %p77 = scmp.eq.s32.totalorder %s29, 1
    %p78 = por %p76, %p77
    %p80 = scmp.ne.s32.totalorder %s63, %s79
    %p81 = scmp.eq.s32.totalorder %s29, 0
    %p82 = por %p80, %p81
    %s83 = ssub.s32 %s23, %s30
    %p84 = scmp.eq.s32.totalorder %s83, 0
    %s86 = sadd.s32 %s85, 1
    %s87 = scalar_select %p84, %s85, %s86
    %p90 = pneg %p84
    %p91 = scmp.eq.s32.totalorder %s23, 1
    %p92 = por %p90, %p91
    %p93 = scmp.ne.s32.totalorder %s85, %s88
    %p94 = scmp.eq.s32.totalorder %s23, 0
    %p95 = por %p93, %p94
    %p96 = scmp.ne.s32.totalorder %s85, %s88
    %p97 = scmp.eq.s32.totalorder %s28, 1
    %p98 = por %p96, %p97
    %p99 = scmp.ne.s32.totalorder %s88, %s89
    %p100 = scmp.eq.s32.totalorder %s28, 0
    %p101 = por %p99, %p100
    %p102 = scmp.ne.s32.totalorder %s88, %s89
    %p103 = scmp.eq.s32.totalorder %s29, 1
    %p104 = por %p102, %p103
    %p106 = scmp.ne.s32.totalorder %s89, %s105
    %p107 = scmp.eq.s32.totalorder %s29, 0
    %p108 = por %p106, %p107
    %s110 = sadd.s32 %s109, 1
    %p113 = scmp.eq.s32.totalorder %s23, 1
    %p114 = scmp.ne.s32.totalorder %s109, %s111
    %p115 = scmp.eq.s32.totalorder %s23, 0
    %p116 = por %p114, %p115
    %p117 = scmp.ne.s32.totalorder %s109, %s111
    %p118 = scmp.eq.s32.totalorder %s28, 1
    %p119 = por %p117, %p118
    %p120 = scmp.ne.s32.totalorder %s111, %s112
    %p121 = scmp.eq.s32.totalorder %s28, 0
    %p122 = por %p120, %p121
    %p123 = scmp.ne.s32.totalorder %s111, %s112
    %p124 = scmp.eq.s32.totalorder %s29, 1
    %p125 = por %p123, %p124
    %p127 = scmp.ne.s32.totalorder %s112, %s126
    %p128 = scmp.eq.s32.totalorder %s29, 0
    %p129 = por %p127, %p128
    %s131 = sadd.s32 %s130, 1
    %p134 = scmp.eq.s32.totalorder %s23, 1
    %p135 = scmp.ne.s32.totalorder %s130, %s132
    %p136 = scmp.eq.s32.totalorder %s23, 0
    %p137 = por %p135, %p136
    %p138 = scmp.ne.s32.totalorder %s130, %s132
    %p139 = scmp.eq.s32.totalorder %s28, 1
    %p140 = por %p138, %p139
    %p141 = scmp.ne.s32.totalorder %s132, %s133
    %p142 = scmp.eq.s32.totalorder %s28, 0
    %p143 = por %p141, %p142
    %p144 = scmp.ne.s32.totalorder %s132, %s133
    %p145 = scmp.eq.s32.totalorder %s29, 1
    %p146 = por %p144, %p145
    %p148 = scmp.ne.s32.totalorder %s133, %s147
    %p149 = scmp.eq.s32.totalorder %s29, 0
    %p150 = por %p148, %p149
    %s152 = sadd.s32 %s151, 1
    %p155 = scmp.eq.s32.totalorder %s23, 1
    %p156 = scmp.ne.s32.totalorder %s151, %s153
    %p157 = scmp.eq.s32.totalorder %s23, 0
    %p158 = por %p156, %p157
    %p159 = scmp.ne.s32.totalorder %s151, %s153
    %p160 = scmp.eq.s32.totalorder %s28, 1
    %p161 = por %p159, %p160
    %p162 = scmp.ne.s32.totalorder %s153, %s154
    %p163 = scmp.eq.s32.totalorder %s28, 0
    %p164 = por %p162, %p163
    %p165 = scmp.ne.s32.totalorder %s153, %s154
    %p166 = scmp.eq.s32.totalorder %s29, 1
    %p167 = por %p165, %p166
    %p169 = scmp.ne.s32.totalorder %s154, %s168
    %p170 = scmp.eq.s32.totalorder %s29, 0
    %p171 = por %p169, %p170
    %s173 = sadd.s32 %s172, 1
    %p176 = scmp.eq.s32.totalorder %s23, 1
    %p177 = scmp.ne.s32.totalorder %s172, %s174
    %p178 = scmp.eq.s32.totalorder %s23, 0
    %p179 = por %p177, %p178
    %p180 = scmp.ne.s32.totalorder %s172, %s174
    %p181 = scmp.eq.s32.totalorder %s28, 1
    %p182 = por %p180, %p181
    %p183 = scmp.ne.s32.totalorder %s174, %s175
    %p184 = scmp.eq.s32.totalorder %s28, 0
    %p185 = por %p183, %p184
    %p186 = scmp.ne.s32.totalorder %s174, %s175
    %p187 = scmp.eq.s32.totalorder %s29, 1
    %p188 = por %p186, %p187
    %p190 = scmp.ne.s32.totalorder %s175, %s189
    %p191 = scmp.eq.s32.totalorder %s29, 0
    %p192 = por %p190, %p191
    %s194 = sadd.s32 %s193, 1
    %p197 = scmp.eq.s32.totalorder %s23, 1
    %p198 = scmp.ne.s32.totalorder %s193, %s195
    %p199 = scmp.eq.s32.totalorder %s23, 0
    %p200 = por %p198, %p199
    %p201 = scmp.ne.s32.totalorder %s193, %s195
    %p202 = scmp.eq.s32.totalorder %s28, 1
    %p203 = por %p201, %p202
    %p204 = scmp.ne.s32.totalorder %s195, %s196
    %p205 = scmp.eq.s32.totalorder %s28, 0
    %p206 = por %p204, %p205
    %p207 = scmp.ne.s32.totalorder %s195, %s196
    %p208 = scmp.eq.s32.totalorder %s29, 1
    %p209 = por %p207, %p208
    %p211 = scmp.ne.s32.totalorder %s196, %s210
    %p212 = scmp.eq.s32.totalorder %s29, 0
    %p213 = por %p211, %p212
    %s215 = sadd.s32 %s214, 1
    %p218 = scmp.eq.s32.totalorder %s23, 1
    %p219 = scmp.ne.s32.totalorder %s214, %s216
    %p220 = scmp.eq.s32.totalorder %s23, 0
    %p221 = por %p219, %p220
    %p222 = scmp.ne.s32.totalorder %s214, %s216
    %p223 = scmp.eq.s32.totalorder %s28, 1
    %p224 = por %p222, %p223
    %p225 = scmp.ne.s32.totalorder %s216, %s217
    %p226 = scmp.eq.s32.totalorder %s28, 0
    %p227 = por %p225, %p226
    %p228 = scmp.ne.s32.totalorder %s216, %s217
    %p229 = scmp.eq.s32.totalorder %s29, 1
    %p230 = por %p228, %p229
    %p232 = scmp.ne.s32.totalorder %s217, %s231
    %p233 = scmp.eq.s32.totalorder %s29, 0
    %p234 = por %p232, %p233
    %s236 = sadd.s32 %s235, 1
    %p239 = scmp.eq.s32.totalorder %s23, 1
    %p240 = scmp.ne.s32.totalorder %s235, %s237
    %p241 = scmp.eq.s32.totalorder %s23, 0
    %p242 = por %p240, %p241
    %p243 = scmp.ne.s32.totalorder %s235, %s237
    %p244 = scmp.eq.s32.totalorder %s28, 1
    %p245 = por %p243, %p244
    %p246 = scmp.ne.s32.totalorder %s237, %s238
    %p247 = scmp.eq.s32.totalorder %s28, 0
    %p248 = por %p246, %p247
    %p249 = scmp.ne.s32.totalorder %s237, %s238
    %p250 = scmp.eq.s32.totalorder %s29, 1
    %p251 = por %p249, %p250
    %p253 = scmp.ne.s32.totalorder %s238, %s252
    %p254 = scmp.eq.s32.totalorder %s29, 0
    %p255 = por %p253, %p254
    %s257 = sadd.s32 %s256, 1
    %p260 = scmp.eq.s32.totalorder %s23, 1
    %p261 = scmp.ne.s32.totalorder %s256, %s258
    %p262 = scmp.eq.s32.totalorder %s23, 0
    %p263 = por %p261, %p262
    %p264 = scmp.ne.s32.totalorder %s256, %s258
    %p265 = scmp.eq.s32.totalorder %s28, 1
    %p266 = por %p264, %p265
    %p267 = scmp.ne.s32.totalorder %s258, %s259
    %p268 = scmp.eq.s32.totalorder %s28, 0
    %p269 = por %p267, %p268
    %p270 = scmp.ne.s32.totalorder %s258, %s259
    %p271 = scmp.eq.s32.totalorder %s29, 1
    %p272 = por %p270, %p271
    %p274 = scmp.ne.s32.totalorder %s259, %s273
    %p275 = scmp.eq.s32.totalorder %s29, 0
    %p276 = por %p274, %p275
    %s278 = sadd.s32 %s277, 1
    %p281 = scmp.eq.s32.totalorder %s23, 1
    %p282 = scmp.ne.s32.totalorder %s277, %s279
    %p283 = scmp.eq.s32.totalorder %s23, 0
    %p284 = por %p282, %p283
    %p285 = scmp.ne.s32.totalorder %s277, %s279
    %p286 = scmp.eq.s32.totalorder %s28, 1
    %p287 = por %p285, %p286
    %p288 = scmp.ne.s32.totalorder %s279, %s280
    %p289 = scmp.eq.s32.totalorder %s28, 0
    %p290 = por %p288, %p289
    %p291 = scmp.ne.s32.totalorder %s279, %s280
    %p292 = scmp.eq.s32.totalorder %s29, 1
    %p293 = por %p291, %p292
    %p295 = scmp.ne.s32.totalorder %s280, %s294
    %p296 = scmp.eq.s32.totalorder %s29, 0
    %p297 = por %p295, %p296
    %s299 = sadd.s32 %s298, 1
    %p302 = scmp.eq.s32.totalorder %s23, 1
    %p303 = scmp.ne.s32.totalorder %s298, %s300
    %p304 = scmp.eq.s32.totalorder %s23, 0
    %p305 = por %p303, %p304
    %p306 = scmp.ne.s32.totalorder %s298, %s300
    %p307 = scmp.eq.s32.totalorder %s28, 1
    %p308 = por %p306, %p307
    %p309 = scmp.ne.s32.totalorder %s300, %s301
    %p310 = scmp.eq.s32.totalorder %s28, 0
    %p311 = por %p309, %p310
    %p312 = scmp.ne.s32.totalorder %s300, %s301
    %p313 = scmp.eq.s32.totalorder %s29, 1
    %p314 = por %p312, %p313
    %p316 = scmp.ne.s32.totalorder %s301, %s315
    %p317 = scmp.eq.s32.totalorder %s29, 0
    %p318 = por %p316, %p317
    %s320 = sadd.s32 %s319, 1
    %p323 = scmp.eq.s32.totalorder %s23, 1
    %p324 = scmp.ne.s32.totalorder %s319, %s321
    %p325 = scmp.eq.s32.totalorder %s23, 0
    %p326 = por %p324, %p325
    %p327 = scmp.ne.s32.totalorder %s319, %s321
    %p328 = scmp.eq.s32.totalorder %s28, 1
    %p329 = por %p327, %p328
    %p330 = scmp.ne.s32.totalorder %s321, %s322
    %p331 = scmp.eq.s32.totalorder %s28, 0
    %p332 = por %p330, %p331
    %p333 = scmp.ne.s32.totalorder %s321, %s322
    %p334 = scmp.eq.s32.totalorder %s29, 1
    %p335 = por %p333, %p334
    %p337 = scmp.ne.s32.totalorder %s322, %s336
    %p338 = scmp.eq.s32.totalorder %s29, 0
    %p339 = por %p337, %p338
    %s341 = sadd.s32 %s340, 1
    %p344 = scmp.eq.s32.totalorder %s23, 1
    %p345 = scmp.ne.s32.totalorder %s340, %s342
    %p346 = scmp.eq.s32.totalorder %s23, 0
    %p347 = por %p345, %p346
    %p348 = scmp.ne.s32.totalorder %s340, %s342
    %p349 = scmp.eq.s32.totalorder %s28, 1
    %p350 = por %p348, %p349
    %p351 = scmp.ne.s32.totalorder %s342, %s343
    %p352 = scmp.eq.s32.totalorder %s28, 0
    %p353 = por %p351, %p352
    %p354 = scmp.ne.s32.totalorder %s342, %s343
    %p355 = scmp.eq.s32.totalorder %s29, 1
    %p356 = por %p354, %p355
    %p358 = scmp.ne.s32.totalorder %s343, %s357
    %p359 = scmp.eq.s32.totalorder %s29, 0
    %p360 = por %p358, %p359
    %s361 = ssub.s32 %s23, %s30
    %p362 = scmp.eq.s32.totalorder %s361, 0
    %s364 = sadd.s32 %s363, 1
    %s365 = scalar_select %p362, %s363, %s364
    %p368 = pneg %p362
    %p369 = scmp.eq.s32.totalorder %s23, 1
    %p370 = por %p368, %p369
    %p371 = scmp.ne.s32.totalorder %s363, %s366
    %p372 = scmp.eq.s32.totalorder %s23, 0
    %p373 = por %p371, %p372
    %p374 = scmp.ne.s32.totalorder %s363, %s366
    %p375 = scmp.eq.s32.totalorder %s28, 1
    %p376 = por %p374, %p375
    %p377 = scmp.ne.s32.totalorder %s366, %s367
    %p378 = scmp.eq.s32.totalorder %s28, 0
    %p379 = por %p377, %p378
    %p380 = scmp.ne.s32.totalorder %s366, %s367
    %p381 = scmp.eq.s32.totalorder %s29, 1
    %p382 = por %p380, %p381
    %p384 = scmp.ne.s32.totalorder %s367, %s383
    %p385 = scmp.eq.s32.totalorder %s29, 0
    %p386 = por %p384, %p385
    %p387 = scmp.le.s32.totalorder 1, %s23
    %p388 = scmp.lt.s32.totalorder %s23, 3
    %p389 = pnand %p387, %p388
    %p390 = pneg %p389
    // Predicated region
    $region9: #{mlfa_forward.1} parent=5 // pred_check
      _
    $region10: #{mlfa_forward.1} parent=5 // pred_check_branch
      %392 = sbr.rel (%p389) target = $region12
    $region11: #{mlfa_forward.1} parent=5 // pred_region
      %s393 = ssub.s32 %s23, 1
      // Predicated region
      $region13: #{mlfa_forward.1} parent=11 // pred_check
        %p394 = pneg %p122
      $region14: #{mlfa_forward.1} parent=11 // pred_check_branch
        %396 = sbr.rel (%p394) target = $region16
      $region15: #{mlfa_forward.1} parent=11 // pred_region
        _
      $region16: #{mlfa_forward.1} parent=11 // pred_fallthru
        _
      // Predicated region
      $region17: #{mlfa_forward.1} parent=11 // pred_check
        %p397 = pneg %p143
      $region18: #{mlfa_forward.1} parent=11 // pred_check_branch
        %399 = sbr.rel (%p397) target = $region20
      $region19: #{mlfa_forward.1} parent=11 // pred_region
        _
      $region20: #{mlfa_forward.1} parent=11 // pred_fallthru
        _
      // Predicated region
      $region21: #{mlfa_forward.1} parent=11 // pred_check
        %p400 = pneg %p164
      $region22: #{mlfa_forward.1} parent=11 // pred_check_branch
        %402 = sbr.rel (%p400) target = $region24
      $region23: #{mlfa_forward.1} parent=11 // pred_region
        _
      $region24: #{mlfa_forward.1} parent=11 // pred_fallthru
        _
      // Predicated region
      $region25: #{mlfa_forward.1} parent=11 // pred_check
        %p403 = pneg %p185
      $region26: #{mlfa_forward.1} parent=11 // pred_check_branch
        %405 = sbr.rel (%p403) target = $region28
      $region27: #{mlfa_forward.1} parent=11 // pred_region
        _
      $region28: #{mlfa_forward.1} parent=11 // pred_fallthru
        _
      // Predicated region
      $region29: #{mlfa_forward.1} parent=11 // pred_check
        %p406 = pneg %p206
      $region30: #{mlfa_forward.1} parent=11 // pred_check_branch
        %408 = sbr.rel (%p406) target = $region32
      $region31: #{mlfa_forward.1} parent=11 // pred_region
        _
      $region32: #{mlfa_forward.1} parent=11 // pred_fallthru
        _
      // Predicated region
      $region33: #{mlfa_forward.1} parent=11 // pred_check
        %p409 = pneg %p227
      $region34: #{mlfa_forward.1} parent=11 // pred_check_branch
        %411 = sbr.rel (%p409) target = $region36
      $region35: #{mlfa_forward.1} parent=11 // pred_region
        _
      $region36: #{mlfa_forward.1} parent=11 // pred_fallthru
        _
      // Predicated region
      $region37: #{mlfa_forward.1} parent=11 // pred_check
        %p412 = pneg %p248
      $region38: #{mlfa_forward.1} parent=11 // pred_check_branch
        %414 = sbr.rel (%p412) target = $region40
      $region39: #{mlfa_forward.1} parent=11 // pred_region
        _
      $region40: #{mlfa_forward.1} parent=11 // pred_fallthru
        _
      // Predicated region
      $region41: #{mlfa_forward.1} parent=11 // pred_check
        %p415 = pneg %p269
      $region42: #{mlfa_forward.1} parent=11 // pred_check_branch
        %417 = sbr.rel (%p415) target = $region44
      $region43: #{mlfa_forward.1} parent=11 // pred_region
        _
      $region44: #{mlfa_forward.1} parent=11 // pred_fallthru
        _
      // Predicated region
      $region45: #{mlfa_forward.1} parent=11 // pred_check
        %p418 = pneg %p290
      $region46: #{mlfa_forward.1} parent=11 // pred_check_branch
        %420 = sbr.rel (%p418) target = $region48
      $region47: #{mlfa_forward.1} parent=11 // pred_region
        _
      $region48: #{mlfa_forward.1} parent=11 // pred_fallthru
        _
      // Predicated region
      $region49: #{mlfa_forward.1} parent=11 // pred_check
        %p421 = pneg %p311
      $region50: #{mlfa_forward.1} parent=11 // pred_check_branch
        %423 = sbr.rel (%p421) target = $region52
      $region51: #{mlfa_forward.1} parent=11 // pred_region
        _
      $region52: #{mlfa_forward.1} parent=11 // pred_fallthru
        _
      // Predicated region
      $region53: #{mlfa_forward.1} parent=11 // pred_check
        %p424 = pneg %p332
      $region54: #{mlfa_forward.1} parent=11 // pred_check_branch
        %426 = sbr.rel (%p424) target = $region56
      $region55: #{mlfa_forward.1} parent=11 // pred_region
        _
      $region56: #{mlfa_forward.1} parent=11 // pred_fallthru
        _
      // Predicated region
      $region57: #{mlfa_forward.1} parent=11 // pred_check
        %p427 = pneg %p353
      $region58: #{mlfa_forward.1} parent=11 // pred_check_branch
        %429 = sbr.rel (%p427) target = $region60
      $region59: #{mlfa_forward.1} parent=11 // pred_region
        _
      $region60: #{mlfa_forward.1} parent=11 // pred_fallthru
        _
    $region12: #{mlfa_forward.1} parent=5 // pred_fallthru
      _
    %p430 = scmp.lt.s32.totalorder %s23, 2
    // Predicated region
    $region61: #{mlfa_forward.1} parent=5 // pred_check
      %p431 = pneg %p430
    $region62: #{mlfa_forward.1} parent=5 // pred_check_branch
      %433 = sbr.rel (%p431) target = $region64
    $region63: #{mlfa_forward.1} parent=5 // pred_region
      // Predicated region
      $region65: #{mlfa_forward.1} parent=63 // pred_check
        %p434 = pneg %p43
      $region66: #{mlfa_forward.1} parent=63 // pred_check_branch
        %436 = sbr.rel (%p434) target = $region68
      $region67: #{mlfa_forward.1} parent=63 // pred_region
        %p437 = scmp.lt.s32.totalorder %s23, 1
        %s438 = scalar_select %p437, %s23, 1
        %s439 = smul.addr %s438, 2
        %s440 = smul.addr %s439, 2
        %s441 = scalar_lea.vmem %s0, %s440
      $region68: #{mlfa_forward.1} parent=63 // pred_fallthru
        _
      // Predicated region
      $region69: #{mlfa_forward.1} parent=63 // pred_check
        %p442 = pneg %p69
      $region70: #{mlfa_forward.1} parent=63 // pred_check_branch
        %444 = sbr.rel (%p442) target = $region72
      $region71: #{mlfa_forward.1} parent=63 // pred_region
        %p445 = scmp.lt.s32.totalorder %s23, 1
        %s446 = scalar_select %p445, %s23, 1
        %s447 = smul.addr %s446, 2
        %s448 = smul.addr %s447, 2
        %s449 = scalar_lea.vmem %s1, %s448
      $region72: #{mlfa_forward.1} parent=63 // pred_fallthru
        _
      // Predicated region
      $region73: #{mlfa_forward.1} parent=63 // pred_check
        %p450 = pneg %p95
      $region74: #{mlfa_forward.1} parent=63 // pred_check_branch
        %452 = sbr.rel (%p450) target = $region76
      $region75: #{mlfa_forward.1} parent=63 // pred_region
        %p453 = scmp.lt.s32.totalorder %s23, 1
        %s454 = scalar_select %p453, %s23, 1
        %s455 = smul.addr %s454, 2
        %s456 = smul.addr %s455, 2
        %s457 = scalar_lea.vmem %s2, %s456
      $region76: #{mlfa_forward.1} parent=63 // pred_fallthru
        _
    $region64: #{mlfa_forward.1} parent=5 // pred_fallthru
      _
    %p458 = scmp.le.s32.totalorder 1, %s23
    %p459 = scmp.lt.s32.totalorder %s23, 3
    %p460 = pnand %p458, %p459
    %p461 = pneg %p460
    // Predicated region
    $region77: #{mlfa_forward.1} parent=5 // pred_check
      _
    $region78: #{mlfa_forward.1} parent=5 // pred_check_branch
      %463 = sbr.rel (%p460) target = $region80
    $region79: #{mlfa_forward.1} parent=5 // pred_region
      %s464 = ssub.s32 %s23, 1
      %p465 = scmp.lt.s32.totalorder %s28, 1
      %s466 = scalar_select %p465, %s28, 1
      %s467 = smul.addr %s466, 2
      %s468 = smul.addr %s467, 2
      %s469 = scalar_lea.vmem %s0, %s468
      %p470 = pneg %p49
      %p471 = pneg %p46
      %p472 = scmp.lt.s32.totalorder %s28, 1
      %s473 = scalar_select %p472, %s28, 1
      %s474 = smul.addr %s473, 2
      %s475 = smul.addr %s474, 2
      %s476 = scalar_lea.vmem %s1, %s475
      %p477 = pneg %p75
      %p478 = pneg %p72
      %p479 = scmp.lt.s32.totalorder %s28, 1
      %s480 = scalar_select %p479, %s28, 1
      %s481 = smul.addr %s480, 2
      %s482 = smul.addr %s481, 2
      %s483 = scalar_lea.vmem %s2, %s482
      %p484 = pneg %p101
      %p485 = pneg %p98
      %p486 = pneg %p122
      %p487 = pneg %p119
      %p488 = pneg %p143
      %p489 = pneg %p140
      %p490 = pneg %p164
      %p491 = pneg %p161
      %p492 = pneg %p185
      %p493 = pneg %p182
      %p494 = pneg %p206
      %p495 = pneg %p203
      %p496 = pneg %p227
      %p497 = pneg %p224
      %p498 = pneg %p248
      %p499 = pneg %p245
      %p500 = pneg %p269
      %p501 = pneg %p266
      %p502 = pneg %p290
      %p503 = pneg %p287
      %p504 = pneg %p311
      %p505 = pneg %p308
      %p506 = pneg %p332
      %p507 = pneg %p329
      %p508 = pneg %p353
      %p509 = pneg %p350
      %p510 = pneg %p379
      %p511 = pneg %p376
      %p512 = scmp.lt.s32.totalorder %s28, 1
      %s513 = scalar_select %p512, %s28, 1
      %s514 = smul.addr %s513, 2
      %s515 = smul.addr %s514, 4
      %s516 = scalar_lea.vmem %s15, %s515
      %p517 = scmp.lt.s32.totalorder %s28, 1
      %s518 = scalar_select %p517, %s28, 1
      %s519 = smul.addr %s518, 2
      %s520 = smul.addr %s519, 2
      %s521 = scalar_lea.vmem %s0, %s520
      %p522 = scmp.lt.s32.totalorder %s28, 1
      %s523 = scalar_select %p522, %s28, 1
      %s524 = smul.addr %s523, 2
      %s525 = smul.addr %s524, 2
      %s526 = scalar_lea.vmem %s1, %s525
      %p527 = scmp.lt.s32.totalorder %s28, 1
      %s528 = scalar_select %p527, %s28, 1
      %s529 = smul.addr %s528, 2
      %s530 = smul.addr %s529, 2
      %s531 = scalar_lea.vmem %s2, %s530
      %p532 = scmp.lt.s32.totalorder %s28, 1
      %s533 = scalar_select %p532, %s28, 1
      %s534 = smul.addr %s533, 2
      %s535 = smul.addr %s534, 4
      %s536 = scalar_lea.vmem %s15, %s535
      %v538 = vld [vmem:[%s521] sm:$0xf]
      %v539 = vld [vmem:[%s526] sm:$0xf]
      %v540 = vld [vmem:[%s531] sm:$0xf]
      %v541 = vld [vmem:[%s3] sm:$0x3]
      %s542 = scalar_lea.vmem %s3, 2
      %v543 = vld [vmem:[%s542] sm:$0x3]
      %s544 = scalar_lea.vmem %s3, 4
      %v545 = vld [vmem:[%s544] sm:$0x3]
      %v546 = vld [vmem:[%s4] sm:$0xf]
      %v549 = vunpack.c.l.s4 1983009808
      %v550 = vunpack.c.0.s8 %v549
      %v551 = vlaneseq
      %v552 = vshrl.u32 %v551, 7
      %v553 = vsub.s32 %v550, %v552
      %v554 = vrot.slane %v539, %v553
      %v555 = vcombine.high %v554, %v554
      %vm556 = vcmask 31744
      %v558 = vsel %vm556, %v543, 0
      %vm560 = vcmask 1041408
      %v562 = vsel %vm560, %v554, 0
      %v565 = vsel %vm560, %v555, 0
      %567 = vmatprep.subr.bf16.mxu0 %v565
      %568 = vmatpush1.bf16.msra.mxu0 %v562
      %569 = vmatprep.subr.bf16.mxu0 0
      %570 = vmatpush1.bf16.msra.mxu0 0
      %571 = vmatprep.subr.bf16.mxu0 0
      %572 = vmatpush1.bf16.msra.mxu0 0
      %573 = vmatprep.subr.bf16.mxu0 0
      %574 = vmatpush1.bf16.msra.mxu0 0
      %575 = vmatprep.subr.bf16.mxu0 0
      %576 = vmatpush1.bf16.msra.mxu0 0
      %577 = vmatprep.subr.bf16.mxu0 0
      %578 = vmatpush1.bf16.msra.mxu0 0
      %579 = vmatprep.subr.bf16.mxu0 0
      %580 = vmatpush1.bf16.msra.mxu0 0
      %581 = vmatprep.subr.bf16.mxu0 0
      %582 = vmatpush1.bf16.msra.mxu0 0
      %583 = vmatprep.subr.bf16.mxu0 0
      %584 = vmatpush1.bf16.msra.mxu0 0
      %585 = vmatprep.subr.bf16.mxu0 0
      %586 = vmatpush1.bf16.msra.mxu0 0
      %587 = vmatprep.subr.bf16.mxu0 0
      %588 = vmatpush1.bf16.msra.mxu0 0
      %589 = vmatprep.subr.bf16.mxu0 0
      %590 = vmatpush1.bf16.msra.mxu0 0
      %591 = vmatprep.subr.bf16.mxu0 0
      %592 = vmatpush1.bf16.msra.mxu0 0
      %593 = vmatprep.subr.bf16.mxu0 0
      %594 = vmatpush1.bf16.msra.mxu0 0
      %595 = vmatprep.subr.bf16.mxu0 0
      %596 = vmatpush1.bf16.msra.mxu0 0
      %597 = vmatprep.subr.bf16.mxu0 0
      %598 = vmatpush1.bf16.msra.mxu0 0
      %599 = vmatprep.mubr.bf16.mxu0 0
      %600 = vmatmul.mubr.bf16.gmra.mrb[0].mxu0 %v558
      %v601 = vpop.f32.mrb[0].mxu0
      %v602 = vadd.f32 0.0, %v601
      %v603 = vpop.f32.mrb[0].mxu0
      %v604 = vadd.f32 0.0, %v603
      %v605 = vpop.f32.mrb[0].mxu0
      %v606 = vpop.f32.mrb[0].mxu0
      %607 = vdwg.mxu0
      %v610 = vunpack.c.l.s4 1983009808
      %v611 = vunpack.c.0.s8 %v610
      %v612 = vlaneseq
      %v613 = vshrl.u32 %v612, 7
      %v614 = vsub.s32 %v611, %v613
      %v615 = vrot.slane %v538, %v614
      %v616 = vcombine.high %v615, %v615
      %v618 = vsel %vm556, %v541, 0
      %v621 = vsel %vm560, %v615, 0
      %v624 = vsel %vm560, %v616, 0
      %626 = vmatprep.subr.bf16.mxu0 %v624
      %627 = vmatpush1.bf16.msra.mxu0 %v621
      %628 = vmatprep.subr.bf16.mxu0 0
      %629 = vmatpush1.bf16.msra.mxu0 0
      %630 = vmatprep.subr.bf16.mxu0 0
      %631 = vmatpush1.bf16.msra.mxu0 0
      %632 = vmatprep.subr.bf16.mxu0 0
      %633 = vmatpush1.bf16.msra.mxu0 0
      %634 = vmatprep.subr.bf16.mxu0 0
      %635 = vmatpush1.bf16.msra.mxu0 0
      %636 = vmatprep.subr.bf16.mxu0 0
      %637 = vmatpush1.bf16.msra.mxu0 0
      %638 = vmatprep.subr.bf16.mxu0 0
      %639 = vmatpush1.bf16.msra.mxu0 0
      %640 = vmatprep.subr.bf16.mxu0 0
      %641 = vmatpush1.bf16.msra.mxu0 0
      %642 = vmatprep.subr.bf16.mxu0 0
      %643 = vmatpush1.bf16.msra.mxu0 0
      %644 = vmatprep.subr.bf16.mxu0 0
      %645 = vmatpush1.bf16.msra.mxu0 0
      %646 = vmatprep.subr.bf16.mxu0 0
      %647 = vmatpush1.bf16.msra.mxu0 0
      %648 = vmatprep.subr.bf16.mxu0 0
      %649 = vmatpush1.bf16.msra.mxu0 0
      %650 = vmatprep.subr.bf16.mxu0 0
      %651 = vmatpush1.bf16.msra.mxu0 0
      %652 = vmatprep.subr.bf16.mxu0 0
      %653 = vmatpush1.bf16.msra.mxu0 0
      %654 = vmatprep.subr.bf16.mxu0 0
      %655 = vmatpush1.bf16.msra.mxu0 0
      %656 = vmatprep.subr.bf16.mxu0 0
      %657 = vmatpush1.bf16.msra.mxu0 0
      %658 = vmatprep.mubr.bf16.mxu0 0
      %659 = vmatmul.mubr.bf16.gmra.mrb[0].mxu0 %v618
      %v660 = vpop.f32.mrb[0].mxu0
      %v661 = vadd.f32 %v602, %v660
      %v662 = vpop.f32.mrb[0].mxu0
      %v663 = vadd.f32 %v604, %v662
      %v664 = vpop.f32.mrb[0].mxu0
      %v665 = vpop.f32.mrb[0].mxu0
      %666 = vdwg.mxu0
      %v669 = vunpack.c.l.s4 1983009808
      %v670 = vunpack.c.0.s8 %v669
      %v671 = vlaneseq
      %v672 = vshrl.u32 %v671, 7
      %v673 = vsub.s32 %v670, %v672
      %v674 = vrot.slane %v540, %v673
      %v675 = vcombine.high %v674, %v674
      %v677 = vsel %vm556, %v545, 0
      %v680 = vsel %vm560, %v674, 0
      %v683 = vsel %vm560, %v675, 0
      %685 = vmatprep.subr.bf16.mxu0 %v683
      %686 = vmatpush1.bf16.msra.mxu0 %v680
      %687 = vmatprep.subr.bf16.mxu0 0
      %688 = vmatpush1.bf16.msra.mxu0 0
      %689 = vmatprep.subr.bf16.mxu0 0
      %690 = vmatpush1.bf16.msra.mxu0 0
      %691 = vmatprep.subr.bf16.mxu0 0
      %692 = vmatpush1.bf16.msra.mxu0 0
      %693 = vmatprep.subr.bf16.mxu0 0
      %694 = vmatpush1.bf16.msra.mxu0 0
      %695 = vmatprep.subr.bf16.mxu0 0
      %696 = vmatpush1.bf16.msra.mxu0 0
      %697 = vmatprep.subr.bf16.mxu0 0
      %698 = vmatpush1.bf16.msra.mxu0 0
      %699 = vmatprep.subr.bf16.mxu0 0
      %700 = vmatpush1.bf16.msra.mxu0 0
      %701 = vmatprep.subr.bf16.mxu0 0
      %702 = vmatpush1.bf16.msra.mxu0 0
      %703 = vmatprep.subr.bf16.mxu0 0
      %704 = vmatpush1.bf16.msra.mxu0 0
      %705 = vmatprep.subr.bf16.mxu0 0
      %706 = vmatpush1.bf16.msra.mxu0 0
      %707 = vmatprep.subr.bf16.mxu0 0
      %708 = vmatpush1.bf16.msra.mxu0 0
      %709 = vmatprep.subr.bf16.mxu0 0
      %710 = vmatpush1.bf16.msra.mxu0 0
      %711 = vmatprep.subr.bf16.mxu0 0
      %712 = vmatpush1.bf16.msra.mxu0 0
      %713 = vmatprep.subr.bf16.mxu0 0
      %714 = vmatpush1.bf16.msra.mxu0 0
      %715 = vmatprep.subr.bf16.mxu0 0
      %716 = vmatpush1.bf16.msra.mxu0 0
      %717 = vmatprep.mubr.bf16.mxu0 0
      %718 = vmatmul.mubr.bf16.gmra.mrb[0].mxu0 %v677
      %v719 = vpop.f32.mrb[0].mxu0
      %v720 = vadd.f32 0.0, %v719
      %v721 = vpop.f32.mrb[0].mxu0
      %v722 = vadd.f32 0.0, %v721
      %v723 = vpop.f32.mrb[0].mxu0
      %v724 = vpop.f32.mrb[0].mxu0
      %725 = vdwg.mxu0
      %v726 = vadd.f32 %v661, %v720
      %v727 = vadd.f32 %v663, %v722
      %729 = vset.pattern.permute.xlu0 0
      %730 = vperm.xlu0 %729, %v546
      %v731 = vpop.permute.xlu0 %730
      %v733 = vadd.f32 %v726, %v731
      %v734 = vadd.f32 %v727, %v731
      %v735 = vpack.c.bf16 %v733, %v733
      %v736 = vpack.c.bf16 %v734, %v734
      %v737 = vld [vmem:[%s5] sm:$0x1]
      %v738 = vld [vmem:[#allocation2] sm:$0x1]
      %740 = vset.pattern.permute.xlu0 0
      %741 = vperm.xlu0 %740, %v738
      %v742 = vpop.permute.xlu0 %741
      %v744 = vlaneseq
      %v745 = vshrl.u32 %v744, 7
      %v746 = vsub.s32 0, %v745
      %v747 = vrot.slane %v742, %v746
      %v749 = vsel %vm556, %v737, 0
      %v752 = vsel %vm560, %v735, 0
      %v755 = vsel %vm560, %v736, 0
      %757 = vmatprep.subr.bf16.mxu0 %v755
      %758 = vmatpush1.bf16.msra.mxu0 %v752
      %759 = vmatprep.subr.bf16.mxu0 0
      %760 = vmatpush1.bf16.msra.mxu0 0
      %761 = vmatprep.subr.bf16.mxu0 0
      %762 = vmatpush1.bf16.msra.mxu0 0
      %763 = vmatprep.subr.bf16.mxu0 0
      %764 = vmatpush1.bf16.msra.mxu0 0
      %765 = vmatprep.subr.bf16.mxu0 0
      %766 = vmatpush1.bf16.msra.mxu0 0
      %767 = vmatprep.subr.bf16.mxu0 0
      %768 = vmatpush1.bf16.msra.mxu0 0
      %769 = vmatprep.subr.bf16.mxu0 0
      %770 = vmatpush1.bf16.msra.mxu0 0
      %771 = vmatprep.subr.bf16.mxu0 0
      %772 = vmatpush1.bf16.msra.mxu0 0
      %773 = vmatprep.subr.bf16.mxu0 0
      %774 = vmatpush1.bf16.msra.mxu0 0
      %775 = vmatprep.subr.bf16.mxu0 0
      %776 = vmatpush1.bf16.msra.mxu0 0
      %777 = vmatprep.subr.bf16.mxu0 0
      %778 = vmatpush1.bf16.msra.mxu0 0
      %779 = vmatprep.subr.bf16.mxu0 0
      %780 = vmatpush1.bf16.msra.mxu0 0
      %781 = vmatprep.subr.bf16.mxu0 0
      %782 = vmatpush1.bf16.msra.mxu0 0
      %783 = vmatprep.subr.bf16.mxu0 0
      %784 = vmatpush1.bf16.msra.mxu0 0
      %785 = vmatprep.subr.bf16.mxu0 0
      %786 = vmatpush1.bf16.msra.mxu0 0
      %787 = vmatprep.subr.bf16.mxu0 0
      %788 = vmatpush1.bf16.msra.mxu0 0
      %789 = vmatprep.mubr.bf16.mxu0 0
      %790 = vmatmul.mubr.bf16.gmra.mrb[0].mxu0 %v749
      %v791 = vpop.f32.mrb[0].mxu0
      %v792 = vadd.f32 %v747, %v791
      %v793 = vpop.f32.mrb[0].mxu0
      %v794 = vadd.f32 %v747, %v793
      %v795 = vpop.f32.mrb[0].mxu0
      %v796 = vpop.f32.mrb[0].mxu0
      %797 = vdwg.mxu0
      %v798 = vxor.u32 %v792, 2147483648
      %v799 = vxor.u32 %v794, 2147483648
      %v800 = vmul.f32 %v798, 1.442695
      %v801 = vpow.pop %v800
      %v802 = vmul.f32 %v799, 1.442695
      %v803 = vpow.pop %v802
      %v804 = vadd.f32 %v801, 1.0
      %v805 = vadd.f32 %v803, 1.0
      %v806 = vrcp.pop %v804
      %v807 = vmul.f32 1.0, %v806
      %v808 = vrcp.pop %v805
      %v809 = vmul.f32 1.0, %v808
      %vm810 = vcmask 1043456
      %v811 = vsel %vm810, %v733, 0.0
      %v812 = vsel %vm810, %v734, 0.0
      %v813 = vadd.f32 %v811, %v812
      %814 = vadd.xlane.f32.xlu0 %v813
      %v815 = vpop.xlane.xlu0 %814
      %v816 = vrcp.pop 256.0
      %v817 = vmul.f32 %v815, %v816
      %v818 = vsel %vm810, %v733, -inf
      %v819 = vsel %vm810, %v734, -inf
      %v820 = vmax.f32 %v818, %v819
      %821 = vmax.xlane.f32.xlu0 %v820
      %v822 = vpop.xlane.xlu0 %821
      %v823 = vld [vmem:[%s7] sm:$0xf]
      %v824 = vld [vmem:[%s8] sm:$0xf]
      %v826 = vsel %vm556, %v824, 0
      %v829 = vsel %vm810, %v822, 0
      %831 = vmatprep.subr.mxu0 0.0
      %832 = vmatpush1.msra.mxu0 %v829
      %833 = vmatprep.subr.mxu0 0.0
      %834 = vmatpush1.msra.mxu0 0.0
      %835 = vmatprep.subr.mxu0 0.0
      %836 = vmatpush1.msra.mxu0 0.0
      %837 = vmatprep.subr.mxu0 0.0
      %838 = vmatpush1.msra.mxu0 0.0
      %839 = vmatprep.subr.mxu0 0.0
      %840 = vmatpush1.msra.mxu0 0.0
      %841 = vmatprep.subr.mxu0 0.0
      %842 = vmatpush1.msra.mxu0 0.0
      %843 = vmatprep.subr.mxu0 0.0
      %844 = vmatpush1.msra.mxu0 0.0
      %845 = vmatprep.subr.mxu0 0.0
      %846 = vmatpush1.msra.mxu0 0.0
      %847 = vmatprep.subr.mxu0 0.0
      %848 = vmatpush1.msra.mxu0 0.0
      %849 = vmatprep.subr.mxu0 0.0
      %850 = vmatpush1.msra.mxu0 0.0
      %851 = vmatprep.subr.mxu0 0.0
      %852 = vmatpush1.msra.mxu0 0.0
      %853 = vmatprep.subr.mxu0 0.0
      %854 = vmatpush1.msra.mxu0 0.0
      %855 = vmatprep.subr.mxu0 0.0
      %856 = vmatpush1.msra.mxu0 0.0
      %857 = vmatprep.subr.mxu0 0.0
      %858 = vmatpush1.msra.mxu0 0.0
      %859 = vmatprep.subr.mxu0 0.0
      %860 = vmatpush1.msra.mxu0 0.0
      %861 = vmatprep.subr.mxu0 0.0
      %862 = vmatpush1.msra.mxu0 0.0
      %863 = vmatprep.subr.mxu0 0.0
      %864 = vmatpush1.msra.mxu0 0.0
      %865 = vmatprep.subr.mxu0 0.0
      %866 = vmatpush1.msra.mxu0 0.0
      %867 = vmatprep.subr.mxu0 0.0
      %868 = vmatpush1.msra.mxu0 0.0
      %869 = vmatprep.subr.mxu0 0.0
      %870 = vmatpush1.msra.mxu0 0.0
      %871 = vmatprep.subr.mxu0 0.0
      %872 = vmatpush1.msra.mxu0 0.0
      %873 = vmatprep.subr.mxu0 0.0
      %874 = vmatpush1.msra.mxu0 0.0
      %875 = vmatprep.subr.mxu0 0.0
      %876 = vmatpush1.msra.mxu0 0.0
      %877 = vmatprep.subr.mxu0 0.0
      %878 = vmatpush1.msra.mxu0 0.0
      %879 = vmatprep.subr.mxu0 0.0
      %880 = vmatpush1.msra.mxu0 0.0
      %881 = vmatprep.subr.mxu0 0.0
      %882 = vmatpush1.msra.mxu0 0.0
      %883 = vmatprep.subr.mxu0 0.0
      %884 = vmatpush1.msra.mxu0 0.0
      %885 = vmatprep.subr.mxu0 0.0
      %886 = vmatpush1.msra.mxu0 0.0
      %887 = vmatprep.subr.mxu0 0.0
      %888 = vmatpush1.msra.mxu0 0.0
      %889 = vmatprep.subr.mxu0 0.0
      %890 = vmatpush1.msra.mxu0 0.0
      %891 = vmatprep.subr.mxu0 0.0
      %892 = vmatpush1.msra.mxu0 0.0
      %893 = vmatprep.subr.mxu0 0.0
      %894 = vmatpush1.msra.mxu0 0.0
      %895 = vmatprep.mubr.f32.mxu0 0.0
      %896 = vmatmul.mubr.f32.gmra.mrb[0].mxu0 %v826
      %v897 = vpop.f32.mrb[0].mxu0
      %v898 = vadd.f32 0.0, %v897
      %v899 = vpop.f32.mrb[0].mxu0
      %900 = vdwg.mxu0
      %v902 = vsel %vm556, %v823, 0
      %v905 = vsel %vm810, %v817, 0
      %907 = vmatprep.subr.mxu0 0.0
      %908 = vmatpush1.msra.mxu0 %v905
      %909 = vmatprep.subr.mxu0 0.0
      %910 = vmatpush1.msra.mxu0 0.0
      %911 = vmatprep.subr.mxu0 0.0
      %912 = vmatpush1.msra.mxu0 0.0
      %913 = vmatprep.subr.mxu0 0.0
      %914 = vmatpush1.msra.mxu0 0.0
      %915 = vmatprep.subr.mxu0 0.0
      %916 = vmatpush1.msra.mxu0 0.0
      %917 = vmatprep.subr.mxu0 0.0
      %918 = vmatpush1.msra.mxu0 0.0
      %919 = vmatprep.subr.mxu0 0.0
      %920 = vmatpush1.msra.mxu0 0.0
      %921 = vmatprep.subr.mxu0 0.0
      %922 = vmatpush1.msra.mxu0 0.0
      %923 = vmatprep.subr.mxu0 0.0
      %924 = vmatpush1.msra.mxu0 0.0
      %925 = vmatprep.subr.mxu0 0.0
      %926 = vmatpush1.msra.mxu0 0.0
      %927 = vmatprep.subr.mxu0 0.0
      %928 = vmatpush1.msra.mxu0 0.0
      %929 = vmatprep.subr.mxu0 0.0
      %930 = vmatpush1.msra.mxu0 0.0
      %931 = vmatprep.subr.mxu0 0.0
      %932 = vmatpush1.msra.mxu0 0.0
      %933 = vmatprep.subr.mxu0 0.0
      %934 = vmatpush1.msra.mxu0 0.0
      %935 = vmatprep.subr.mxu0 0.0
      %936 = vmatpush1.msra.mxu0 0.0
      %937 = vmatprep.subr.mxu0 0.0
      %938 = vmatpush1.msra.mxu0 0.0
      %939 = vmatprep.subr.mxu0 0.0
      %940 = vmatpush1.msra.mxu0 0.0
      %941 = vmatprep.subr.mxu0 0.0
      %942 = vmatpush1.msra.mxu0 0.0
      %943 = vmatprep.subr.mxu0 0.0
      %944 = vmatpush1.msra.mxu0 0.0
      %945 = vmatprep.subr.mxu0 0.0
      %946 = vmatpush1.msra.mxu0 0.0
      %947 = vmatprep.subr.mxu0 0.0
      %948 = vmatpush1.msra.mxu0 0.0
      %949 = vmatprep.subr.mxu0 0.0
      %950 = vmatpush1.msra.mxu0 0.0
      %951 = vmatprep.subr.mxu0 0.0
      %952 = vmatpush1.msra.mxu0 0.0
      %953 = vmatprep.subr.mxu0 0.0
      %954 = vmatpush1.msra.mxu0 0.0
      %955 = vmatprep.subr.mxu0 0.0
      %956 = vmatpush1.msra.mxu0 0.0
      %957 = vmatprep.subr.mxu0 0.0
      %958 = vmatpush1.msra.mxu0 0.0
      %959 = vmatprep.subr.mxu0 0.0
      %960 = vmatpush1.msra.mxu0 0.0
      %961 = vmatprep.subr.mxu0 0.0
      %962 = vmatpush1.msra.mxu0 0.0
      %963 = vmatprep.subr.mxu0 0.0
      %964 = vmatpush1.msra.mxu0 0.0
      %965 = vmatprep.subr.mxu0 0.0
      %966 = vmatpush1.msra.mxu0 0.0
      %967 = vmatprep.subr.mxu0 0.0
      %968 = vmatpush1.msra.mxu0 0.0
      %969 = vmatprep.subr.mxu0 0.0
      %970 = vmatpush1.msra.mxu0 0.0
      %971 = vmatprep.mubr.f32.mxu0 0.0
      %972 = vmatmul.mubr.f32.gmra.mrb[0].mxu0 %v902
      %v973 = vpop.f32.mrb[0].mxu0
      %v974 = vadd.f32 %v898, %v973
      %v975 = vpop.f32.mrb[0].mxu0
      %976 = vdwg.mxu0
      %v977 = vld [vmem:[%s9] sm:$0xf]
      %v978 = vadd.f32 %v974, %v977
      %v980 = vrot.slane %v978, 1
      %v982 = vmax.f32 %v978, %v980
      %v984 = vrot.slane %v982, 2
      %v986 = vmax.f32 %v982, %v984
      %v987 = vlaneseq
      %v988 = vshrl.u32 %v987, 7
      %v989 = vsub.s32 0, %v988
      %v990 = vrot.slane %v986, %v989
      %v991 = vsub.f32 %v978, %v990
      %v992 = vmul.f32 %v991, 1.442695
      %v993 = vpow.pop %v992
      %v995 = vrot.slane %v993, 1
      %v997 = vadd.f32 %v993, %v995
      %v998 = vrot.slane %v993, 2
      %v1000 = vadd.f32 %v997, %v998
      %v1001 = vrot.slane %v993, 3
      %v1003 = vadd.f32 %v1000, %v1001
      %v1004 = vlaneseq
      %v1005 = vshrl.u32 %v1004, 7
      %v1006 = vsub.s32 0, %v1005
      %v1007 = vrot.slane %v1003, %v1006
      %v1008 = vrcp.pop %v1007
      %v1009 = vmul.f32 %v993, %v1008
      %v1010 = vunpack.c.l.bf16 %v538
      %v1011 = vlaneseq
      %v1012 = vshrl.u32 %v1011, 7
      %v1013 = vsub.s32 0, %v1012
      %v1014 = vrot.slane %v807, %v1013
      %v1015 = vlaneseq
      %v1016 = vshrl.u32 %v1015, 7
      %v1017 = vsub.s32 0, %v1016
      %v1018 = vrot.slane %v809, %v1017
      %v1021 = vcombine.low %v1014, %v1018
      %v1023 = vmul.f32 %v1010, %v1021
      %v1025 = vcombine.high %v1023, %v1023
      %v1027 = vpack.c.bf16 %v1023, %v1023
      %v1028 = vpack.c.bf16 %v1025, %v1025
      %v1030 = vsel %vm560, %v1027, 0
      %v1033 = vsel %vm560, %v1028, 0
      %1035 = vmatprep.subr.bf16.mxu0 %v1033
      %1036 = vmatpush1.bf16.msra.mxu0 %v1030
      %1037 = vmatprep.subr.bf16.mxu0 0
      %1038 = vmatpush1.bf16.msra.mxu0 0
      %1039 = vmatprep.subr.bf16.mxu0 0
      %1040 = vmatpush1.bf16.msra.mxu0 0
      %1041 = vmatprep.subr.bf16.mxu0 0
      %1042 = vmatpush1.bf16.msra.mxu0 0
      %1043 = vmatprep.subr.bf16.mxu0 0
      %1044 = vmatpush1.bf16.msra.mxu0 0
      %1045 = vmatprep.subr.bf16.mxu0 0
      %1046 = vmatpush1.bf16.msra.mxu0 0
      %1047 = vmatprep.subr.bf16.mxu0 0
      %1048 = vmatpush1.bf16.msra.mxu0 0
      %1049 = vmatprep.subr.bf16.mxu0 0
      %1050 = vmatpush1.bf16.msra.mxu0 0
      %1051 = vmatprep.subr.bf16.mxu0 0
      %1052 = vmatpush1.bf16.msra.mxu0 0
      %1053 = vmatprep.subr.bf16.mxu0 0
      %1054 = vmatpush1.bf16.msra.mxu0 0
      %1055 = vmatprep.subr.bf16.mxu0 0
      %1056 = vmatpush1.bf16.msra.mxu0 0
      %1057 = vmatprep.subr.bf16.mxu0 0
      %1058 = vmatpush1.bf16.msra.mxu0 0
      %1059 = vmatprep.subr.bf16.mxu0 0
      %1060 = vmatpush1.bf16.msra.mxu0 0
      %1061 = vmatprep.subr.bf16.mxu0 0
      %1062 = vmatpush1.bf16.msra.mxu0 0
      %1063 = vmatprep.subr.bf16.mxu0 0
      %1064 = vmatpush1.bf16.msra.mxu0 0
      %1065 = vmatprep.subr.bf16.mxu0 0
      %1066 = vmatpush1.bf16.msra.mxu0 0
      %1067 = vmatprep.mubr.bf16.mxu0 0
      %1068 = vmatmul.mubr.bf16.gmra.mrb[0].mxu0 %v618
      %v1069 = vpop.f32.mrb[0].mxu0
      %v1070 = vadd.f32 0.0, %v1069
      %v1071 = vpop.f32.mrb[0].mxu0
      %v1072 = vadd.f32 0.0, %v1071
      %v1073 = vpop.f32.mrb[0].mxu0
      %v1074 = vpop.f32.mrb[0].mxu0
      %1075 = vdwg.mxu0
      %s1077 = vtos %v1009
      %v1078 = vstv %s1077
      %v1080 = vmul.f32 %v1078, %v1070
      %v1081 = vmul.f32 %v1078, %v1072
      %v1082 = vunpack.c.l.bf16 %v539
      %v1083 = vmul.f32 %v1082, %v1021
      %v1085 = vcombine.high %v1083, %v1083
      %v1087 = vpack.c.bf16 %v1083, %v1083
      %v1088 = vpack.c.bf16 %v1085, %v1085
      %v1090 = vsel %vm560, %v1087, 0
      %v1093 = vsel %vm560, %v1088, 0
      %1095 = vmatprep.subr.bf16.mxu0 %v1093
      %1096 = vmatpush1.bf16.msra.mxu0 %v1090
      %1097 = vmatprep.subr.bf16.mxu0 0
      %1098 = vmatpush1.bf16.msra.mxu0 0
      %1099 = vmatprep.subr.bf16.mxu0 0
      %1100 = vmatpush1.bf16.msra.mxu0 0
      %1101 = vmatprep.subr.bf16.mxu0 0
      %1102 = vmatpush1.bf16.msra.mxu0 0
      %1103 = vmatprep.subr.bf16.mxu0 0
      %1104 = vmatpush1.bf16.msra.mxu0 0
      %1105 = vmatprep.subr.bf16.mxu0 0
      %1106 = vmatpush1.bf16.msra.mxu0 0
      %1107 = vmatprep.subr.bf16.mxu0 0
      %1108 = vmatpush1.bf16.msra.mxu0 0
      %1109 = vmatprep.subr.bf16.mxu0 0
      %1110 = vmatpush1.bf16.msra.mxu0 0
      %1111 = vmatprep.subr.bf16.mxu0 0
      %1112 = vmatpush1.bf16.msra.mxu0 0
      %1113 = vmatprep.subr.bf16.mxu0 0
      %1114 = vmatpush1.bf16.msra.mxu0 0
      %1115 = vmatprep.subr.bf16.mxu0 0
      %1116 = vmatpush1.bf16.msra.mxu0 0
      %1117 = vmatprep.subr.bf16.mxu0 0
      %1118 = vmatpush1.bf16.msra.mxu0 0
      %1119 = vmatprep.subr.bf16.mxu0 0
      %1120 = vmatpush1.bf16.msra.mxu0 0
      %1121 = vmatprep.subr.bf16.mxu0 0
      %1122 = vmatpush1.bf16.msra.mxu0 0
      %1123 = vmatprep.subr.bf16.mxu0 0
      %1124 = vmatpush1.bf16.msra.mxu0 0
      %1125 = vmatprep.subr.bf16.mxu0 0
      %1126 = vmatpush1.bf16.msra.mxu0 0
      %1127 = vmatprep.mubr.bf16.mxu0 0
      %1128 = vmatmul.mubr.bf16.gmra.mrb[0].mxu0 %v558
      %v1129 = vpop.f32.mrb[0].mxu0
      %v1130 = vadd.f32 0.0, %v1129
      %v1131 = vpop.f32.mrb[0].mxu0
      %v1132 = vadd.f32 0.0, %v1131
      %v1133 = vpop.f32.mrb[0].mxu0
      %v1134 = vpop.f32.mrb[0].mxu0
      %1135 = vdwg.mxu0
      %v1136 = vrot.slane %v1009, 1
      %s1137 = vtos %v1136
      %v1138 = vstv %s1137
      %v1140 = vmul.f32 %v1138, %v1130
      %v1141 = vmul.f32 %v1138, %v1132
      %v1142 = vadd.f32 %v1080, %v1140
      %v1143 = vadd.f32 %v1081, %v1141
      %v1144 = vunpack.c.l.bf16 %v540
      %v1145 = vmul.f32 %v1144, %v1021
      %v1147 = vcombine.high %v1145, %v1145
      %v1149 = vpack.c.bf16 %v1145, %v1145
      %v1150 = vpack.c.bf16 %v1147, %v1147
      %v1152 = vsel %vm560, %v1149, 0
      %v1155 = vsel %vm560, %v1150, 0
      %1157 = vmatprep.subr.bf16.mxu0 %v1155
      %1158 = vmatpush1.bf16.msra.mxu0 %v1152
      %1159 = vmatprep.subr.bf16.mxu0 0
      %1160 = vmatpush1.bf16.msra.mxu0 0
      %1161 = vmatprep.subr.bf16.mxu0 0
      %1162 = vmatpush1.bf16.msra.mxu0 0
      %1163 = vmatprep.subr.bf16.mxu0 0
      %1164 = vmatpush1.bf16.msra.mxu0 0
      %1165 = vmatprep.subr.bf16.mxu0 0
      %1166 = vmatpush1.bf16.msra.mxu0 0
      %1167 = vmatprep.subr.bf16.mxu0 0
      %1168 = vmatpush1.bf16.msra.mxu0 0
      %1169 = vmatprep.subr.bf16.mxu0 0
      %1170 = vmatpush1.bf16.msra.mxu0 0
      %1171 = vmatprep.subr.bf16.mxu0 0
      %1172 = vmatpush1.bf16.msra.mxu0 0
      %1173 = vmatprep.subr.bf16.mxu0 0
      %1174 = vmatpush1.bf16.msra.mxu0 0
      %1175 = vmatprep.subr.bf16.mxu0 0
      %1176 = vmatpush1.bf16.msra.mxu0 0
      %1177 = vmatprep.subr.bf16.mxu0 0
      %1178 = vmatpush1.bf16.msra.mxu0 0
      %1179 = vmatprep.subr.bf16.mxu0 0
      %1180 = vmatpush1.bf16.msra.mxu0 0
      %1181 = vmatprep.subr.bf16.mxu0 0
      %1182 = vmatpush1.bf16.msra.mxu0 0
      %1183 = vmatprep.subr.bf16.mxu0 0
      %1184 = vmatpush1.bf16.msra.mxu0 0
      %1185 = vmatprep.subr.bf16.mxu0 0
      %1186 = vmatpush1.bf16.msra.mxu0 0
      %1187 = vmatprep.subr.bf16.mxu0 0
      %1188 = vmatpush1.bf16.msra.mxu0 0
      %1189 = vmatprep.mubr.bf16.mxu0 0
      %1190 = vmatmul.mubr.bf16.gmra.mrb[0].mxu0 %v677
      %v1191 = vpop.f32.mrb[0].mxu0
      %v1192 = vadd.f32 0.0, %v1191
      %v1193 = vpop.f32.mrb[0].mxu0
      %v1194 = vadd.f32 0.0, %v1193
      %v1195 = vpop.f32.mrb[0].mxu0
      %v1196 = vpop.f32.mrb[0].mxu0
      %1197 = vdwg.mxu0
      %v1198 = vrot.slane %v1009, 2
      %s1199 = vtos %v1198
      %v1200 = vstv %s1199
      %v1202 = vmul.f32 %v1200, %v1192
      %v1203 = vmul.f32 %v1200, %v1194
      %v1204 = vadd.f32 %v1142, %v1202
      %v1205 = vadd.f32 %v1143, %v1203
      %v1206 = vadd.f32 %v1204, %v731
      %v1207 = vadd.f32 %v1205, %v731
      %v1210 = vrot.slane %v1206, 4
      %v1211 = vrot.slane %v1207, 4
      %v1214 = vsel %vm810, %v733, %v1210
      %v1215 = vsel %vm810, %v734, %v1211
      %v1216 = vld [vmem:[%s14] sm:$0xff]
      %v1217 = vld [vmem:[%s14 + $0x8] sm:$0xff]
      %v1218 = vld [vmem:[%s14 + $0x10] sm:$0x1]
      %v1219 = vld [vmem:[%s14 + $0x18] sm:$0x1]
      %1220 = vrot.lane.b32.xlu0 %v1214, 17
      %v1221 = vpop.permute.xlu0 %1220
      %1222 = vrot.lane.b32.xlu0 %v1215, 17
      %v1223 = vpop.permute.xlu0 %1222
      %v1224 = vlaneseq
      %v1225 = vand.u32 %v1224, 127
      %vm1226 = vcmp.lt.s32.totalorder %v1225, 17
      %v1227 = vsel %vm1226, %v1221, %v1223
      %v1228 = vsel %vm1226, %v1223, %v1221
      %v1229 = vlaneseq
      %v1230 = vshrl.u32 %v1229, 7
      %v1231 = vsub.s32 0, %v1230
      %v1232 = vrot.slane %v1216, %v1231
      %v1233 = vlaneseq
      %v1234 = vshrl.u32 %v1233, 7
      %v1235 = vsub.s32 0, %v1234
      %v1236 = vrot.slane %v1217, %v1235
      %v1237 = vmul.f32 %v1228, %v1232
      %v1238 = vmul.f32 %v1227, %v1236
      %1239 = vrot.lane.b32.xlu0 %v1214, 16
      %v1240 = vpop.permute.xlu0 %1239
      %1241 = vrot.lane.b32.xlu0 %v1215, 16
      %v1242 = vpop.permute.xlu0 %1241
      %vm1243 = vcmp.lt.s32.totalorder %v1225, 16
      %v1244 = vsel %vm1243, %v1240, %v1242
      %v1245 = vsel %vm1243, %v1242, %v1240
      %v1246 = vlaneseq
      %v1247 = vshrl.u32 %v1246, 7
      %v1248 = vsub.s32 1, %v1247
      %v1249 = vrot.slane %v1216, %v1248
      %v1250 = vlaneseq
      %v1251 = vshrl.u32 %v1250, 7
      %v1252 = vsub.s32 1, %v1251
      %v1253 = vrot.slane %v1217, %v1252
      %v1254 = vmul.f32 %v1245, %v1249
      %v1255 = vmul.f32 %v1244, %v1253
      %1256 = vrot.lane.b32.xlu0 %v1214, 15
      %v1257 = vpop.permute.xlu0 %1256
      %1258 = vrot.lane.b32.xlu0 %v1215, 15
      %v1259 = vpop.permute.xlu0 %1258
      %vm1260 = vcmp.lt.s32.totalorder %v1225, 15
      %v1261 = vsel %vm1260, %v1257, %v1259
      %v1262 = vsel %vm1260, %v1259, %v1257
      %v1263 = vlaneseq
      %v1264 = vshrl.u32 %v1263, 7
      %v1265 = vsub.s32 2, %v1264
      %v1266 = vrot.slane %v1216, %v1265
      %v1267 = vlaneseq
      %v1268 = vshrl.u32 %v1267, 7
      %v1269 = vsub.s32 2, %v1268
      %v1270 = vrot.slane %v1217, %v1269
      %v1271 = vmul.f32 %v1262, %v1266
      %v1272 = vmul.f32 %v1261, %v1270
      %1273 = vrot.lane.b32.xlu0 %v1214, 1
      %v1274 = vpop.permute.xlu0 %1273
      %1275 = vrot.lane.b32.xlu0 %v1215, 1
      %v1276 = vpop.permute.xlu0 %1275
      %vm1277 = vcmp.lt.s32.totalorder %v1225, 1
      %v1278 = vsel %vm1277, %v1274, %v1276
      %v1279 = vsel %vm1277, %v1276, %v1274
      %v1280 = vlaneseq
      %v1281 = vshrl.u32 %v1280, 7
      %v1282 = vsub.s32 3, %v1281
      %v1283 = vrot.slane %v1216, %v1282
      %v1284 = vlaneseq
      %v1285 = vshrl.u32 %v1284, 7
      %v1286 = vsub.s32 3, %v1285
      %v1287 = vrot.slane %v1217, %v1286
      %v1288 = vmul.f32 %v1279, %v1283
      %v1289 = vmul.f32 %v1278, %v1287
      %1290 = vrot.lane.b32.xlu0 %v1214, 127
      %v1291 = vpop.permute.xlu0 %1290
      %1292 = vrot.lane.b32.xlu0 %v1215, 127
      %v1293 = vpop.permute.xlu0 %1292
      %vm1294 = vcmp.lt.s32.totalorder %v1225, 127
      %v1295 = vsel %vm1294, %v1291, %v1293
      %v1296 = vsel %vm1294, %v1293, %v1291
      %v1297 = vlaneseq
      %v1298 = vshrl.u32 %v1297, 7
      %v1299 = vsub.s32 5, %v1298
      %v1300 = vrot.slane %v1216, %v1299
      %v1301 = vlaneseq
      %v1302 = vshrl.u32 %v1301, 7
      %v1303 = vsub.s32 5, %v1302
      %v1304 = vrot.slane %v1217, %v1303
      %v1305 = vmul.f32 %v1295, %v1300
      %v1306 = vmul.f32 %v1296, %v1304
      %1307 = vrot.lane.b32.xlu0 %v1214, 113
      %v1308 = vpop.permute.xlu0 %1307
      %1309 = vrot.lane.b32.xlu0 %v1215, 113
      %v1310 = vpop.permute.xlu0 %1309
      %vm1311 = vcmp.lt.s32.totalorder %v1225, 113
      %v1312 = vsel %vm1311, %v1308, %v1310
      %v1313 = vsel %vm1311, %v1310, %v1308
      %v1314 = vlaneseq
      %v1315 = vshrl.u32 %v1314, 7
      %v1316 = vsub.s32 6, %v1315
      %v1317 = vrot.slane %v1216, %v1316
      %v1318 = vlaneseq
      %v1319 = vshrl.u32 %v1318, 7
      %v1320 = vsub.s32 6, %v1319
      %v1321 = vrot.slane %v1217, %v1320
      %v1322 = vmul.f32 %v1312, %v1317
      %v1323 = vmul.f32 %v1313, %v1321
      %1324 = vrot.lane.b32.xlu0 %v1214, 112
      %v1325 = vpop.permute.xlu0 %1324
      %1326 = vrot.lane.b32.xlu0 %v1215, 112
      %v1327 = vpop.permute.xlu0 %1326
      %vm1328 = vcmp.lt.s32.totalorder %v1225, 112
      %v1329 = vsel %vm1328, %v1325, %v1327
      %v1330 = vsel %vm1328, %v1327, %v1325
      %v1331 = vlaneseq
      %v1332 = vshrl.u32 %v1331, 7
      %v1333 = vsub.s32 7, %v1332
      %v1334 = vrot.slane %v1216, %v1333
      %v1335 = vlaneseq
      %v1336 = vshrl.u32 %v1335, 7
      %v1337 = vsub.s32 7, %v1336
      %v1338 = vrot.slane %v1217, %v1337
      %v1339 = vmul.f32 %v1329, %v1334
      %v1340 = vmul.f32 %v1330, %v1338
      %1341 = vrot.lane.b32.xlu0 %v1214, 111
      %v1342 = vpop.permute.xlu0 %1341
      %1343 = vrot.lane.b32.xlu0 %v1215, 111
      %v1344 = vpop.permute.xlu0 %1343
      %vm1345 = vcmp.lt.s32.totalorder %v1225, 111
      %v1346 = vsel %vm1345, %v1342, %v1344
      %v1347 = vsel %vm1345, %v1344, %v1342
      %v1348 = vlaneseq
      %v1349 = vshrl.u32 %v1348, 7
      %v1350 = vsub.s32 0, %v1349
      %v1351 = vrot.slane %v1218, %v1350
      %v1352 = vlaneseq
      %v1353 = vshrl.u32 %v1352, 7
      %v1354 = vsub.s32 0, %v1353
      %v1355 = vrot.slane %v1219, %v1354
      %v1356 = vmul.f32 %v1346, %v1351
      %v1357 = vmul.f32 %v1347, %v1355
      %v1358 = vpack.c.bf16 %v1254, %v1237
      %v1359 = vpack.c.bf16 %v1255, %v1238
      %v1360 = vpack.c.bf16 %v1288, %v1271
      %v1361 = vpack.c.bf16 %v1289, %v1272
      %v1362 = vpack.c.bf16 %v1305, %v1214
      %v1363 = vpack.c.bf16 %v1306, %v1215
      %v1364 = vpack.c.bf16 %v1339, %v1322
      %v1365 = vpack.c.bf16 %v1340, %v1323
      %v1366 = vpack.c.bf16 %v1356, %v1356
      %v1367 = vpack.c.bf16 %v1357, %v1357
      %v1368 = vld [vmem:[%s10] sm:$0x3]
      %v1369 = vld [vmem:[%s11] sm:$0xf]
      %1371 = vset.pattern.permute.xlu0 0
      %1372 = vperm.xlu0 %1371, %v1369
      %v1373 = vpop.permute.xlu0 %1372
      %vm1375 = vcmask 588800
      %v1377 = vsel %vm1375, %v1368, 0
      %v1380 = vsel %vm810, %v1366, 0
      %v1383 = vsel %vm810, %v1367, 0
      %1385 = vmatprep.subr.bf16.mxu0 %v1359
      %1386 = vmatpush1.bf16.msra.mxu0 %v1358
      %1387 = vmatprep.subr.bf16.mxu0 %v1361
      %1388 = vmatpush1.bf16.msra.mxu0 %v1360
      %1389 = vmatprep.subr.bf16.mxu0 %v1363
      %1390 = vmatpush1.bf16.msra.mxu0 %v1362
      %1391 = vmatprep.subr.bf16.mxu0 %v1365
      %1392 = vmatpush1.bf16.msra.mxu0 %v1364
      %1393 = vmatprep.subr.bf16.mxu0 %v1383
      %1394 = vmatpush1.bf16.msra.mxu0 %v1380
      %1395 = vmatprep.subr.bf16.mxu0 0
      %1396 = vmatpush1.bf16.msra.mxu0 0
      %1397 = vmatprep.subr.bf16.mxu0 0
      %1398 = vmatpush1.bf16.msra.mxu0 0
      %1399 = vmatprep.subr.bf16.mxu0 0
      %1400 = vmatpush1.bf16.msra.mxu0 0
      %1401 = vmatprep.subr.bf16.mxu0 0
      %1402 = vmatpush1.bf16.msra.mxu0 0
      %1403 = vmatprep.subr.bf16.mxu0 0
      %1404 = vmatpush1.bf16.msra.mxu0 0
      %1405 = vmatprep.subr.bf16.mxu0 0
      %1406 = vmatpush1.bf16.msra.mxu0 0
      %1407 = vmatprep.subr.bf16.mxu0 0
      %1408 = vmatpush1.bf16.msra.mxu0 0
      %1409 = vmatprep.subr.bf16.mxu0 0
      %1410 = vmatpush1.bf16.msra.mxu0 0
      %1411 = vmatprep.subr.bf16.mxu0 0
      %1412 = vmatpush1.bf16.msra.mxu0 0
      %1413 = vmatprep.subr.bf16.mxu0 0
      %1414 = vmatpush1.bf16.msra.mxu0 0
      %1415 = vmatprep.subr.bf16.mxu0 0
      %1416 = vmatpush1.bf16.msra.mxu0 0
      %1417 = vmatprep.mubr.bf16.mxu0 0
      %1418 = vmatmul.mubr.bf16.gmra.mrb[0].mxu0 %v1377
      %v1419 = vpop.f32.mrb[0].mxu0
      %v1420 = vadd.f32 %v1373, %v1419
      %v1421 = vpop.f32.mrb[0].mxu0
      %v1422 = vadd.f32 %v1373, %v1421
      %v1423 = vpop.f32.mrb[0].mxu0
      %v1424 = vpop.f32.mrb[0].mxu0
      %1425 = vdwg.mxu0
      %v1426 = vmax.f32 %v1420, 0.0
      %v1427 = vmax.f32 %v1422, 0.0
      %v1428 = vpack.c.bf16 %v1426, %v1426
      %v1429 = vpack.c.bf16 %v1427, %v1427
      %v1430 = vld [vmem:[%s12] sm:$0x3]
      %v1431 = vld [vmem:[%s13] sm:$0xf]
      %1433 = vset.pattern.permute.xlu0 0
      %1434 = vperm.xlu0 %1433, %v1431
      %v1435 = vpop.permute.xlu0 %1434
      %v1438 = vsel %vm556, %v1430, 0
      %v1441 = vsel %vm560, %v1428, 0
      %v1444 = vsel %vm560, %v1429, 0
      %1446 = vmatprep.subr.bf16.mxu0 %v1444
      %1447 = vmatpush1.bf16.msra.mxu0 %v1441
      %1448 = vmatprep.subr.bf16.mxu0 0
      %1449 = vmatpush1.bf16.msra.mxu0 0
      %1450 = vmatprep.subr.bf16.mxu0 0
      %1451 = vmatpush1.bf16.msra.mxu0 0
      %1452 = vmatprep.subr.bf16.mxu0 0
      %1453 = vmatpush1.bf16.msra.mxu0 0
      %1454 = vmatprep.subr.bf16.mxu0 0
      %1455 = vmatpush1.bf16.msra.mxu0 0
      %1456 = vmatprep.subr.bf16.mxu0 0
      %1457 = vmatpush1.bf16.msra.mxu0 0
      %1458 = vmatprep.subr.bf16.mxu0 0
      %1459 = vmatpush1.bf16.msra.mxu0 0
      %1460 = vmatprep.subr.bf16.mxu0 0
      %1461 = vmatpush1.bf16.msra.mxu0 0
      %1462 = vmatprep.subr.bf16.mxu0 0
      %1463 = vmatpush1.bf16.msra.mxu0 0
      %1464 = vmatprep.subr.bf16.mxu0 0
      %1465 = vmatpush1.bf16.msra.mxu0 0
      %1466 = vmatprep.subr.bf16.mxu0 0
      %1467 = vmatpush1.bf16.msra.mxu0 0
      %1468 = vmatprep.subr.bf16.mxu0 0
      %1469 = vmatpush1.bf16.msra.mxu0 0
      %1470 = vmatprep.subr.bf16.mxu0 0
      %1471 = vmatpush1.bf16.msra.mxu0 0
      %1472 = vmatprep.subr.bf16.mxu0 0
      %1473 = vmatpush1.bf16.msra.mxu0 0
      %1474 = vmatprep.subr.bf16.mxu0 0
      %1475 = vmatpush1.bf16.msra.mxu0 0
      %1476 = vmatprep.subr.bf16.mxu0 0
      %1477 = vmatpush1.bf16.msra.mxu0 0
      %1478 = vmatprep.mubr.bf16.mxu0 0
      %1479 = vmatmul.mubr.bf16.gmra.mrb[0].mxu0 %v1438
      %v1480 = vpop.f32.mrb[0].mxu0
      %v1481 = vadd.f32 %v1435, %v1480
      %v1482 = vpop.f32.mrb[0].mxu0
      %v1483 = vadd.f32 %v1435, %v1482
      %v1484 = vpop.f32.mrb[0].mxu0
      %v1485 = vpop.f32.mrb[0].mxu0
      %1486 = vdwg.mxu0
      %v1489 = vcombine.low %v1481, %v1483
      %1491 = vst [vmem:[%s536] sm:$0xff] %v1489
      %p1492 = scmp.lt.s32.totalorder %s28, 1
      %s1493 = scalar_select %p1492, %s28, 1
      %s1494 = smul.addr %s1493, 2
      %s1495 = smul.addr %s1494, 4
      %s1496 = scalar_lea.vmem %s15, %s1495
      // Predicated region
      $region81: #{mlfa_forward.1} parent=79 // pred_check
        %p1497 = pneg %p376
      $region82: #{mlfa_forward.1} parent=79 // pred_check_branch
        %1499 = sbr.rel (%p1497) target = $region84
      $region83: #{mlfa_forward.1} parent=79 // pred_region
        _
      $region84: #{mlfa_forward.1} parent=79 // pred_fallthru
        _
    $region80: #{mlfa_forward.1} parent=5 // pred_fallthru
      _
    %p1500 = scmp.le.s32.totalorder 2, %s23
    // Predicated region
    $region85: #{mlfa_forward.1} parent=5 // pred_check
      %p1501 = pneg %p1500
    $region86: #{mlfa_forward.1} parent=5 // pred_check_branch
      %1503 = sbr.rel (%p1501) target = $region88
    $region87: #{mlfa_forward.1} parent=5 // pred_region
      %s1504 = ssub.s32 %s23, 2
      // Predicated region
      $region89: #{mlfa_forward.1} parent=87 // pred_check
        %p1505 = pneg %p382
      $region90: #{mlfa_forward.1} parent=87 // pred_check_branch
        %1507 = sbr.rel (%p1505) target = $region92
      $region91: #{mlfa_forward.1} parent=87 // pred_region
        %p1508 = scmp.lt.s32.totalorder %s29, 1
        %s1509 = scalar_select %p1508, %s29, 1
        %s1510 = smul.addr %s1509, 2
        %s1511 = smul.addr %s1510, 4
        %s1512 = scalar_lea.vmem %s15, %s1511
      $region92: #{mlfa_forward.1} parent=87 // pred_fallthru
        _
    $region88: #{mlfa_forward.1} parent=5 // pred_fallthru
      _
  $region6: #{mlfa_forward.1} parent=0 // loop_footer
    %s27 = sadd.s32 1, %s23
  $region7: #{mlfa_forward.1} parent=0 // loop_footer_branch
    %22 = sbr.rel target = $region3
  $region8: #{mlfa_forward.1} parent=0 // loop_exit
    _

</llo_original>
